<compile_context>
chip_gen: v7x
topology: tpu7x:2x2x1
jax: 0.10.0
libtpu: 0.0.40
codegen_flags: <defaults>
</compile_context>

<pallas_src>
import jax
import jax.numpy as jnp
from jax.experimental import pallas as pl
from jax.experimental.pallas import tpu as pltpu

# ---- problem sizes ------------------------------------------------------------
BATCH = 256        # many states per call so launch/DMA overhead is amortized
TILE_B = 128       # batch tile per grid step (sublane-aligned)
STATE_DIM = 16     # hyper_ps['state_dim']
HIDDEN = 32        # hyper_ps['a_hidden_size'] (scaled down)
HIDDEN_LAYERS = 3  # hyper_ps['a_hidden_layers'] (scaled down)
ACTION_DIM = 8     # hyper_ps['action_dim']


def actor_kernel(state_ref,    # (TILE_B, S)
                 w0_ref,       # (S, H)        resident
                 wh_ref,       # (L, H, H)     resident
                 wm_ref,       # (H, A)        resident
                 bias_ref,     # (L+2, H)      resident, packed biases
                 gumbel_ref,   # (TILE_B, A)   pre-drawn Gumbel noise
                 probs_ref,    # out (TILE_B, A) f32
                 action_ref):  # out (TILE_B, 1) i32
    biases = bias_ref[...]                      # (L+2, H)

    # --- MLP base: Linear + ReLU stack (all matmuls on the MXU) ----------------
    x = jnp.dot(state_ref[...], w0_ref[...], preferred_element_type=jnp.float32)
    x = jnp.maximum(x + biases[0:1, :], 0.0)
    for i in range(HIDDEN_LAYERS):              # static unroll over stacked layers
        x = jnp.dot(x, wh_ref[i], preferred_element_type=jnp.float32)
        x = jnp.maximum(x + biases[i + 1:i + 2, :], 0.0)

    # --- fc_mean + softmax ------------------------------------------------------
    mean = jnp.dot(x, wm_ref[...], preferred_element_type=jnp.float32)
    mean = mean + biases[HIDDEN_LAYERS + 1:HIDDEN_LAYERS + 2, :ACTION_DIM]
    m = jnp.max(mean, axis=-1, keepdims=True)
    e = jnp.exp(mean - m)
    denom = jnp.sum(e, axis=-1, keepdims=True)
    probs_ref[...] = e / denom

    # --- Categorical sample via Gumbel-max --------------------------------------
    z = (mean - m) + gumbel_ref[...]
    zmax = jnp.max(z, axis=-1, keepdims=True)
    idx = jax.lax.broadcasted_iota(jnp.int32, z.shape, 1)
    # argmax via min-index over the (z >= zmax) mask; kept as a (TILE_B, 1) block
    # (last dim equals the full output dim, so the store stays legal and simple).
    action_ref[...] = jnp.min(
        jnp.where(z >= zmax, idx, jnp.int32(ACTION_DIM)),
        axis=-1, keepdims=True)


@jax.jit
def actor_forward(state, w0, wh, wm, biases, gumbel):
    B = state.shape[0]
    A = wm.shape[1]
    nb = B // TILE_B
    probs, action = pl.pallas_call(
        actor_kernel,
        out_shape=(jax.ShapeDtypeStruct((B, A), jnp.float32),
                   jax.ShapeDtypeStruct((B, 1), jnp.int32)),
        grid=(nb,),
        in_specs=[
            pl.BlockSpec((TILE_B, STATE_DIM), lambda i: (i, 0)),
            # weights / packed biases: same block every step -> VMEM-resident
            pl.BlockSpec((STATE_DIM, HIDDEN), lambda i: (0, 0)),
            pl.BlockSpec((HIDDEN_LAYERS, HIDDEN, HIDDEN), lambda i: (0, 0, 0)),
            pl.BlockSpec((HIDDEN, ACTION_DIM), lambda i: (0, 0)),
            pl.BlockSpec((HIDDEN_LAYERS + 2, HIDDEN), lambda i: (0, 0)),
            pl.BlockSpec((TILE_B, ACTION_DIM), lambda i: (i, 0)),
        ],
        out_specs=(
            pl.BlockSpec((TILE_B, ACTION_DIM), lambda i: (i, 0)),
            pl.BlockSpec((TILE_B, 1), lambda i: (i, 0)),
        ),
        compiler_params=pltpu.CompilerParams(
            dimension_semantics=("parallel",)),   # batch tiles across TCs (v7x)
    )(state, w0, wh, wm, biases, gumbel)
    return probs, action


def init_params(key):
    """Deterministic parameter init (Kaiming-ish scaling, like PyTorch default)."""
    ks = jax.random.split(key, HIDDEN_LAYERS + 2)

    def linear(k, fan_in, fan_out):
        k1, k2 = jax.random.split(k)
        bound = 1.0 / jnp.sqrt(float(fan_in))
        w = jax.random.uniform(k1, (fan_in, fan_out), jnp.float32, -bound, bound)
        b = jax.random.uniform(k2, (fan_out,), jnp.float32, -bound, bound)
        return w, b

    w0, b0 = linear(ks[0], STATE_DIM, HIDDEN)
    whs, bhs = [], []
    for i in range(HIDDEN_LAYERS):
        w, b = linear(ks[1 + i], HIDDEN, HIDDEN)
        whs.append(w)
        bhs.append(b)
    wh = jnp.stack(whs)                                     # (L, H, H)
    wm, bm = linear(ks[HIDDEN_LAYERS + 1], HIDDEN, ACTION_DIM)

    # pack all biases into one dense (L+2, HIDDEN) array:
    #   row 0          -> b0
    #   rows 1..L      -> hidden-layer biases
    #   row L+1[:A]    -> fc_mean bias (rest zero-padded)
    biases = jnp.zeros((HIDDEN_LAYERS + 2, HIDDEN), jnp.float32)
    biases = biases.at[0].set(b0)
    for i in range(HIDDEN_LAYERS):
        biases = biases.at[1 + i].set(bhs[i])
    biases = biases.at[HIDDEN_LAYERS + 1, :ACTION_DIM].set(bm)
    # fc_logsd exists in the module but is unused by forward(); omitted.
    return w0, wh, wm, biases


def reference_probs(state, w0, wh, wm, biases):
    x = jnp.maximum(state @ w0 + biases[0], 0.0)
    for i in range(HIDDEN_LAYERS):
        x = jnp.maximum(x @ wh[i] + biases[1 + i], 0.0)
    mean = x @ wm + biases[HIDDEN_LAYERS + 1, :ACTION_DIM]
    return jax.nn.softmax(mean, axis=-1)


if __name__ == "__main__":
    key = jax.random.PRNGKey(0)
    k_state, k_params, k_gumbel = jax.random.split(key, 3)
    state = jax.random.normal(k_state, (BATCH, STATE_DIM), jnp.float32)
    w0, wh, wm, biases = init_params(k_params)
    gumbel = jax.random.gumbel(k_gumbel, (BATCH, ACTION_DIM), jnp.float32)

    probs, action = actor_forward(state, w0, wh, wm, biases, gumbel)
    jax.block_until_ready((probs, action))

    # correctness check of the deterministic part (softmax probabilities);
    # tolerance accounts for MXU bf16-pass f32 matmuls vs. the XLA reference.
    ref = reference_probs(state, w0, wh, wm, biases)
    assert jnp.allclose(probs, ref, atol=2e-3, rtol=2e-3), "probs mismatch"
    assert probs.shape == (BATCH, ACTION_DIM)
    assert bool(jnp.allclose(jnp.sum(probs, axis=-1), 1.0, atol=1e-3))
    assert action.shape == (BATCH, 1)
    assert bool(jnp.all((action >= 0) & (action < ACTION_DIM)))

    print("KERNEL_OK")
</pallas_src>

<mosaic_0001>
module attributes {stable_mosaic.version = 11 : i64} {
  func.func @actor_kernel(%arg0: i32, %arg1: memref<128x16xf32, #tpu.memory_space<vmem>>, %arg2: memref<16x32xf32, #tpu.memory_space<vmem>>, %arg3: memref<3x32x32xf32, #tpu.memory_space<vmem>>, %arg4: memref<32x8xf32, #tpu.memory_space<vmem>>, %arg5: memref<5x32xf32, #tpu.memory_space<vmem>>, %arg6: memref<128x8xf32, #tpu.memory_space<vmem>>, %arg7: memref<128x8xf32, #tpu.memory_space<vmem>>, %arg8: memref<128x1xi32, #tpu.memory_space<vmem>>) attributes {dimension_semantics = [#tpu.dimension_semantics<parallel>], iteration_bounds = array<i64: 2>, scalar_prefetch = 0 : i64, scratch_operands = 0 : i64, tpu.core_type = #tpu.core_type<tc>, window_params = [{transform_indices = @transform_0, window_bounds = array<i64: 128, 16>}, {pipeline_mode = #tpu.pipeline_mode<synchronous>, transform_indices = @transform_1, window_bounds = array<i64: 16, 32>}, {pipeline_mode = #tpu.pipeline_mode<synchronous>, transform_indices = @transform_2, window_bounds = array<i64: 3, 32, 32>}, {pipeline_mode = #tpu.pipeline_mode<synchronous>, transform_indices = @transform_3, window_bounds = array<i64: 32, 8>}, {pipeline_mode = #tpu.pipeline_mode<synchronous>, transform_indices = @transform_4, window_bounds = array<i64: 5, 32>}, {transform_indices = @transform_5, window_bounds = array<i64: 128, 8>}, {transform_indices = @transform_6, window_bounds = array<i64: 128, 8>}, {transform_indices = @transform_7, window_bounds = array<i64: 128, 1>}]} {
    %c0 = arith.constant 0 : index
    %c0_0 = arith.constant 0 : index
    %0 = vector.load %arg5[%c0, %c0_0] : memref<5x32xf32, #tpu.memory_space<vmem>>, vector<5x32xf32>
    %c0_1 = arith.constant 0 : index
    %c0_2 = arith.constant 0 : index
    %1 = vector.load %arg1[%c0_1, %c0_2] : memref<128x16xf32, #tpu.memory_space<vmem>>, vector<128x16xf32>
    %c0_3 = arith.constant 0 : index
    %c0_4 = arith.constant 0 : index
    %2 = vector.load %arg2[%c0_3, %c0_4] : memref<16x32xf32, #tpu.memory_space<vmem>>, vector<16x32xf32>
    %cst = arith.constant dense<0.000000e+00> : vector<128x32xf32>
    %3 = tpu.matmul %1, %2, %cst {dimension_numbers = #tpu.dot_dimension_numbers<[1], [0], [0], [1], [0, 0, 1, 1], [], []>} : vector<128x16xf32>, vector<16x32xf32>, vector<128x32xf32> -> vector<128x32xf32>
    %4 = vector.extract_strided_slice %0 {offsets = [0, 0], sizes = [1, 32], strides = [1, 1]} : vector<5x32xf32> to vector<1x32xf32>
    %5 = vector.broadcast %4 : vector<1x32xf32> to vector<128x32xf32>
    %6 = arith.addf %3, %5 : vector<128x32xf32>
    %cst_5 = arith.constant 0.000000e+00 : f32
    %7 = vector.broadcast %cst_5 : f32 to vector<128x32xf32>
    %8 = arith.maximumf %6, %7 : vector<128x32xf32>
    %c0_6 = arith.constant 0 : index
    %c0_7 = arith.constant 0 : index
    %c0_8 = arith.constant 0 : index
    %9 = vector.load %arg3[%c0_6, %c0_7, %c0_8] : memref<3x32x32xf32, #tpu.memory_space<vmem>>, vector<1x32x32xf32>
    %10 = vector.shape_cast %9 : vector<1x32x32xf32> to vector<32x32xf32>
    %cst_9 = arith.constant dense<0.000000e+00> : vector<128x32xf32>
    %11 = tpu.matmul %8, %10, %cst_9 {dimension_numbers = #tpu.dot_dimension_numbers<[1], [0], [0], [1], [0, 0, 1, 1], [], []>} : vector<128x32xf32>, vector<32x32xf32>, vector<128x32xf32> -> vector<128x32xf32>
    %12 = vector.extract_strided_slice %0 {offsets = [1, 0], sizes = [1, 32], strides = [1, 1]} : vector<5x32xf32> to vector<1x32xf32>
    %13 = vector.broadcast %12 : vector<1x32xf32> to vector<128x32xf32>
    %14 = arith.addf %11, %13 : vector<128x32xf32>
    %cst_10 = arith.constant 0.000000e+00 : f32
    %15 = vector.broadcast %cst_10 : f32 to vector<128x32xf32>
    %16 = arith.maximumf %14, %15 : vector<128x32xf32>
    %c1 = arith.constant 1 : index
    %c0_11 = arith.constant 0 : index
    %c0_12 = arith.constant 0 : index
    %17 = vector.load %arg3[%c1, %c0_11, %c0_12] : memref<3x32x32xf32, #tpu.memory_space<vmem>>, vector<1x32x32xf32>
    %18 = vector.shape_cast %17 : vector<1x32x32xf32> to vector<32x32xf32>
    %cst_13 = arith.constant dense<0.000000e+00> : vector<128x32xf32>
    %19 = tpu.matmul %16, %18, %cst_13 {dimension_numbers = #tpu.dot_dimension_numbers<[1], [0], [0], [1], [0, 0, 1, 1], [], []>} : vector<128x32xf32>, vector<32x32xf32>, vector<128x32xf32> -> vector<128x32xf32>
    %20 = vector.extract_strided_slice %0 {offsets = [2, 0], sizes = [1, 32], strides = [1, 1]} : vector<5x32xf32> to vector<1x32xf32>
    %21 = vector.broadcast %20 : vector<1x32xf32> to vector<128x32xf32>
    %22 = arith.addf %19, %21 : vector<128x32xf32>
    %cst_14 = arith.constant 0.000000e+00 : f32
    %23 = vector.broadcast %cst_14 : f32 to vector<128x32xf32>
    %24 = arith.maximumf %22, %23 : vector<128x32xf32>
    %c2 = arith.constant 2 : index
    %c0_15 = arith.constant 0 : index
    %c0_16 = arith.constant 0 : index
    %25 = vector.load %arg3[%c2, %c0_15, %c0_16] : memref<3x32x32xf32, #tpu.memory_space<vmem>>, vector<1x32x32xf32>
    %26 = vector.shape_cast %25 : vector<1x32x32xf32> to vector<32x32xf32>
    %cst_17 = arith.constant dense<0.000000e+00> : vector<128x32xf32>
    %27 = tpu.matmul %24, %26, %cst_17 {dimension_numbers = #tpu.dot_dimension_numbers<[1], [0], [0], [1], [0, 0, 1, 1], [], []>} : vector<128x32xf32>, vector<32x32xf32>, vector<128x32xf32> -> vector<128x32xf32>
    %28 = vector.extract_strided_slice %0 {offsets = [3, 0], sizes = [1, 32], strides = [1, 1]} : vector<5x32xf32> to vector<1x32xf32>
    %29 = vector.broadcast %28 : vector<1x32xf32> to vector<128x32xf32>
    %30 = arith.addf %27, %29 : vector<128x32xf32>
    %cst_18 = arith.constant 0.000000e+00 : f32
    %31 = vector.broadcast %cst_18 : f32 to vector<128x32xf32>
    %32 = arith.maximumf %30, %31 : vector<128x32xf32>
    %c0_19 = arith.constant 0 : index
    %c0_20 = arith.constant 0 : index
    %33 = vector.load %arg4[%c0_19, %c0_20] : memref<32x8xf32, #tpu.memory_space<vmem>>, vector<32x8xf32>
    %cst_21 = arith.constant dense<0.000000e+00> : vector<128x8xf32>
    %34 = tpu.matmul %32, %33, %cst_21 {dimension_numbers = #tpu.dot_dimension_numbers<[1], [0], [0], [1], [0, 0, 1, 1], [], []>} : vector<128x32xf32>, vector<32x8xf32>, vector<128x8xf32> -> vector<128x8xf32>
    %35 = vector.extract_strided_slice %0 {offsets = [4, 0], sizes = [1, 8], strides = [1, 1]} : vector<5x32xf32> to vector<1x8xf32>
    %36 = vector.broadcast %35 : vector<1x8xf32> to vector<128x8xf32>
    %37 = arith.addf %34, %36 : vector<128x8xf32>
    %cst_22 = arith.constant dense<0xFF800000> : vector<128xf32>
    %38 = vector.multi_reduction <maximumf>, %37, %cst_22 [1] : vector<128x8xf32> to vector<128xf32>
    %39 = vector.shape_cast %38 : vector<128xf32> to vector<128x1xf32>
    %40 = vector.broadcast %39 : vector<128x1xf32> to vector<128x8xf32>
    %41 = arith.subf %37, %40 : vector<128x8xf32>
    %42 = math.exp %41 : vector<128x8xf32>
    %cst_23 = arith.constant dense<0.000000e+00> : vector<128xf32>
    %43 = vector.multi_reduction <add>, %42, %cst_23 [1] : vector<128x8xf32> to vector<128xf32>
    %44 = vector.shape_cast %43 : vector<128xf32> to vector<128x1xf32>
    %45 = vector.broadcast %44 : vector<128x1xf32> to vector<128x8xf32>
    %46 = arith.divf %42, %45 : vector<128x8xf32>
    %c0_24 = arith.constant 0 : index
    %c0_25 = arith.constant 0 : index
    %47 = vector.load %arg7[%c0_24, %c0_25] : memref<128x8xf32, #tpu.memory_space<vmem>>, vector<128x8xf32>
    tpu.vector_store %arg7[%c0_24, %c0_25], %46 {strides = array<i32>} : memref<128x8xf32, #tpu.memory_space<vmem>>, vector<128x8xf32>,
    %48 = vector.broadcast %39 : vector<128x1xf32> to vector<128x8xf32>
    %49 = arith.subf %37, %48 : vector<128x8xf32>
    %c0_26 = arith.constant 0 : index
    %c0_27 = arith.constant 0 : index
    %50 = vector.load %arg6[%c0_26, %c0_27] : memref<128x8xf32, #tpu.memory_space<vmem>>, vector<128x8xf32>
    %51 = arith.addf %49, %50 : vector<128x8xf32>
    %cst_28 = arith.constant dense<0xFF800000> : vector<128xf32>
    %52 = vector.multi_reduction <maximumf>, %51, %cst_28 [1] : vector<128x8xf32> to vector<128xf32>
    %53 = vector.shape_cast %52 : vector<128xf32> to vector<128x1xf32>
    %54 = tpu.iota {dimensions = array<i32: 1>} : vector<128x8xi32>
    %55 = vector.broadcast %53 : vector<128x1xf32> to vector<128x8xf32>
    %56 = arith.cmpf oge, %51, %55 : vector<128x8xf32>
    %c8_i32 = arith.constant 8 : i32
    %57 = vector.broadcast %c8_i32 : i32 to vector<128x8xi32>
    %58 = arith.select %56, %54, %57 : vector<128x8xi1>, vector<128x8xi32>
    %cst_29 = arith.constant dense<2147483647> : vector<128xi32>
    %59 = vector.multi_reduction <minsi>, %58, %cst_29 [1] : vector<128x8xi32> to vector<128xi32>
    %60 = vector.shape_cast %59 : vector<128xi32> to vector<128x1xi32>
    %c0_30 = arith.constant 0 : index
    %c0_31 = arith.constant 0 : index
    %61 = vector.load %arg8[%c0_30, %c0_31] : memref<128x1xi32, #tpu.memory_space<vmem>>, vector<128x1xi32>
    tpu.vector_store %arg8[%c0_30, %c0_31], %60 {strides = array<i32>} : memref<128x1xi32, #tpu.memory_space<vmem>>, vector<128x1xi32>,
    return
  }
  func.func @transform_0(%arg0: i32) -> (i32, i32) {
    %c0_i32 = arith.constant 0 : i32
    %c0_i32_0 = arith.constant 0 : i32
    return %arg0, %c0_i32 : i32, i32
  }
  func.func @transform_1(%arg0: i32) -> (i32, i32) {
    %c0_i32 = arith.constant 0 : i32
    %c0_i32_0 = arith.constant 0 : i32
    %c0_i32_1 = arith.constant 0 : i32
    return %c0_i32, %c0_i32_0 : i32, i32
  }
  func.func @transform_2(%arg0: i32) -> (i32, i32, i32) {
    %c0_i32 = arith.constant 0 : i32
    %c0_i32_0 = arith.constant 0 : i32
    %c0_i32_1 = arith.constant 0 : i32
    %c0_i32_2 = arith.constant 0 : i32
    return %c0_i32, %c0_i32_0, %c0_i32_1 : i32, i32, i32
  }
  func.func @transform_3(%arg0: i32) -> (i32, i32) {
    %c0_i32 = arith.constant 0 : i32
    %c0_i32_0 = arith.constant 0 : i32
    %c0_i32_1 = arith.constant 0 : i32
    return %c0_i32, %c0_i32_0 : i32, i32
  }
  func.func @transform_4(%arg0: i32) -> (i32, i32) {
    %c0_i32 = arith.constant 0 : i32
    %c0_i32_0 = arith.constant 0 : i32
    %c0_i32_1 = arith.constant 0 : i32
    return %c0_i32, %c0_i32_0 : i32, i32
  }
  func.func @transform_5(%arg0: i32) -> (i32, i32) {
    %c0_i32 = arith.constant 0 : i32
    %c0_i32_0 = arith.constant 0 : i32
    return %arg0, %c0_i32 : i32, i32
  }
  func.func @transform_6(%arg0: i32) -> (i32, i32) {
    %c0_i32 = arith.constant 0 : i32
    %c0_i32_0 = arith.constant 0 : i32
    return %arg0, %c0_i32 : i32, i32
  }
  func.func @transform_7(%arg0: i32) -> (i32, i32) {
    %c0_i32 = arith.constant 0 : i32
    %c0_i32_0 = arith.constant 0 : i32
    return %arg0, %c0_i32 : i32, i32
  }
}

</mosaic_0001>

<llo_original>
// kernel: actor_forward.1
$region0: #{actor_forward.1}
  #allocation0 [shape = 'u32[]', space=smem, size = 0x4, offset = 0x4, fixed_abs, tag = 'smem constant byte address 0x4 - core index']
  #allocation1 [shape = 'u32[144,128]{1,0:T(1,128)}', space=vmem, size = 0x12000, scoped, tag = 'internal scratch']
  %s0 = inlined_call_operand.vmem [shape: f32[256,16], index: 0, kind: input, shape index: {}]
  %s1 = inlined_call_operand.vmem [shape: f32[16,32], index: 1, kind: input, shape index: {}]
  %s2 = inlined_call_operand.vmem [shape: f32[3,32,32], index: 2, kind: input, shape index: {}]
  %s3 = inlined_call_operand.vmem [shape: f32[32,8], index: 3, kind: input, shape index: {}]
  %s4 = inlined_call_operand.vmem [shape: f32[5,32], index: 4, kind: input, shape index: {}]
  %s5 = inlined_call_operand.vmem [shape: f32[256,8], index: 5, kind: input, shape index: {}]
  %s6 = inlined_call_operand.vmem [shape: f32[256,8], index: 6, kind: output, shape index: {0}]
  %s7 = inlined_call_operand.vmem [shape: s32[256,1], index: 7, kind: output, shape index: {1}]
  %8 = xla_tuple %s6, %s7
  %s9 = sld [smem:[#allocation0]]
  $region65: #{actor_forward.1} parent=0
    _
  %s11 = ssub.s32 1, %s9
  %s12 = scalar_select 0, %s11, %s9
  loop: start=0, step=1, limit=4
  $region2: #{actor_forward.1} parent=0 // loop_pre_header
    _
  $region3: #{actor_forward.1} parent=0 // loop_header
    %s14 = sphi 0, %s18
    %p15 = scmp.ge.s32.totalorder %s14, 4
    %s24 = sphi 0, %s26
    %s27 = sphi 0, %s24
    %s28 = sphi 0, %s27
    %s44 = sphi 0, %s28
    %s48 = sphi 0, %s48
    %s50 = sphi 0, %s48
    %s51 = sphi 0, %s50
    %s65 = sphi 0, %s51
    %s69 = sphi 0, %s69
    %s71 = sphi 0, %s69
    %s72 = sphi 0, %s71
    %s86 = sphi 0, %s72
    %s90 = sphi 0, %s90
    %s92 = sphi 0, %s90
    %s93 = sphi 0, %s92
    %s107 = sphi 0, %s93
    %s111 = sphi 0, %s111
    %s113 = sphi 0, %s111
    %s114 = sphi 0, %s113
    %s128 = sphi 0, %s114
    %s134 = sphi 0, %s136
    %s137 = sphi 0, %s134
    %s138 = sphi 0, %s137
    %s154 = sphi 0, %s138
    %s160 = sphi 0, %s162
    %s163 = sphi 0, %s160
    %s164 = sphi 0, %s163
    %s180 = sphi 0, %s164
    %s186 = sphi 0, %s188
    %s189 = sphi 0, %s186
    %s190 = sphi 0, %s189
    %s206 = sphi 0, %s190
  $region4: #{actor_forward.1} parent=0 // loop_header_branch
    %17 = sbr.rel (%p15) target = $region8
  $region5: #{actor_forward.1} parent=0 // loop_body
    %s19 = ssub.s32 %s14, 1
    %s20 = ssub.s32 %s14, 2
    %s21 = sadd.s32 %s14, 1
    %s22 = ssub.s32 %s14, %s21
    %p23 = scmp.eq.s32.totalorder %s22, 0
    %s25 = sadd.s32 %s24, 1
    %s26 = scalar_select %p23, %s24, %s25
    %p29 = pneg %p23
    %p30 = scmp.eq.s32.totalorder %s14, 1
    %p31 = por %p29, %p30
    %p32 = scmp.ne.s32.totalorder %s24, %s27
    %p33 = scmp.eq.s32.totalorder %s14, 0
    %p34 = por %p32, %p33
    %p35 = scmp.ne.s32.totalorder %s24, %s27
    %p36 = scmp.eq.s32.totalorder %s19, 1
    %p37 = por %p35, %p36
    %p38 = scmp.ne.s32.totalorder %s27, %s28
    %p39 = scmp.eq.s32.totalorder %s19, 0
    %p40 = por %p38, %p39
    %p41 = scmp.ne.s32.totalorder %s27, %s28
    %p42 = scmp.eq.s32.totalorder %s20, 1
    %p43 = por %p41, %p42
    %p45 = scmp.ne.s32.totalorder %s28, %s44
    %p46 = scmp.eq.s32.totalorder %s20, 0
    %p47 = por %p45, %p46
    %s49 = sadd.s32 %s48, 1
    %p52 = scmp.eq.s32.totalorder %s14, 1
    %p53 = scmp.ne.s32.totalorder %s48, %s50
    %p54 = scmp.eq.s32.totalorder %s14, 0
    %p55 = por %p53, %p54
    %p56 = scmp.ne.s32.totalorder %s48, %s50
    %p57 = scmp.eq.s32.totalorder %s19, 1
    %p58 = por %p56, %p57
    %p59 = scmp.ne.s32.totalorder %s50, %s51
    %p60 = scmp.eq.s32.totalorder %s19, 0
    %p61 = por %p59, %p60
    %p62 = scmp.ne.s32.totalorder %s50, %s51
    %p63 = scmp.eq.s32.totalorder %s20, 1
    %p64 = por %p62, %p63
    %p66 = scmp.ne.s32.totalorder %s51, %s65
    %p67 = scmp.eq.s32.totalorder %s20, 0
    %p68 = por %p66, %p67
    %s70 = sadd.s32 %s69, 1
    %p73 = scmp.eq.s32.totalorder %s14, 1
    %p74 = scmp.ne.s32.totalorder %s69, %s71
    %p75 = scmp.eq.s32.totalorder %s14, 0
    %p76 = por %p74, %p75
    %p77 = scmp.ne.s32.totalorder %s69, %s71
    %p78 = scmp.eq.s32.totalorder %s19, 1
    %p79 = por %p77, %p78
    %p80 = scmp.ne.s32.totalorder %s71, %s72
    %p81 = scmp.eq.s32.totalorder %s19, 0
    %p82 = por %p80, %p81
    %p83 = scmp.ne.s32.totalorder %s71, %s72
    %p84 = scmp.eq.s32.totalorder %s20, 1
    %p85 = por %p83, %p84
    %p87 = scmp.ne.s32.totalorder %s72, %s86
    %p88 = scmp.eq.s32.totalorder %s20, 0
    %p89 = por %p87, %p88
    %s91 = sadd.s32 %s90, 1
    %p94 = scmp.eq.s32.totalorder %s14, 1
    %p95 = scmp.ne.s32.totalorder %s90, %s92
    %p96 = scmp.eq.s32.totalorder %s14, 0
    %p97 = por %p95, %p96
    %p98 = scmp.ne.s32.totalorder %s90, %s92
    %p99 = scmp.eq.s32.totalorder %s19, 1
    %p100 = por %p98, %p99
    %p101 = scmp.ne.s32.totalorder %s92, %s93
    %p102 = scmp.eq.s32.totalorder %s19, 0
    %p103 = por %p101, %p102
    %p104 = scmp.ne.s32.totalorder %s92, %s93
    %p105 = scmp.eq.s32.totalorder %s20, 1
    %p106 = por %p104, %p105
    %p108 = scmp.ne.s32.totalorder %s93, %s107
    %p109 = scmp.eq.s32.totalorder %s20, 0
    %p110 = por %p108, %p109
    %s112 = sadd.s32 %s111, 1
    %p115 = scmp.eq.s32.totalorder %s14, 1
    %p116 = scmp.ne.s32.totalorder %s111, %s113
    %p117 = scmp.eq.s32.totalorder %s14, 0
    %p118 = por %p116, %p117
    %p119 = scmp.ne.s32.totalorder %s111, %s113
    %p120 = scmp.eq.s32.totalorder %s19, 1
    %p121 = por %p119, %p120
    %p122 = scmp.ne.s32.totalorder %s113, %s114
    %p123 = scmp.eq.s32.totalorder %s19, 0
    %p124 = por %p122, %p123
    %p125 = scmp.ne.s32.totalorder %s113, %s114
    %p126 = scmp.eq.s32.totalorder %s20, 1
    %p127 = por %p125, %p126
    %p129 = scmp.ne.s32.totalorder %s114, %s128
    %p130 = scmp.eq.s32.totalorder %s20, 0
    %p131 = por %p129, %p130
    %s132 = ssub.s32 %s14, %s21
    %p133 = scmp.eq.s32.totalorder %s132, 0
    %s135 = sadd.s32 %s134, 1
    %s136 = scalar_select %p133, %s134, %s135
    %p139 = pneg %p133
    %p140 = scmp.eq.s32.totalorder %s14, 1
    %p141 = por %p139, %p140
    %p142 = scmp.ne.s32.totalorder %s134, %s137
    %p143 = scmp.eq.s32.totalorder %s14, 0
    %p144 = por %p142, %p143
    %p145 = scmp.ne.s32.totalorder %s134, %s137
    %p146 = scmp.eq.s32.totalorder %s19, 1
    %p147 = por %p145, %p146
    %p148 = scmp.ne.s32.totalorder %s137, %s138
    %p149 = scmp.eq.s32.totalorder %s19, 0
    %p150 = por %p148, %p149
    %p151 = scmp.ne.s32.totalorder %s137, %s138
    %p152 = scmp.eq.s32.totalorder %s20, 1
    %p153 = por %p151, %p152
    %p155 = scmp.ne.s32.totalorder %s138, %s154
    %p156 = scmp.eq.s32.totalorder %s20, 0
    %p157 = por %p155, %p156
    %s158 = ssub.s32 %s14, %s21
    %p159 = scmp.eq.s32.totalorder %s158, 0
    %s161 = sadd.s32 %s160, 1
    %s162 = scalar_select %p159, %s160, %s161
    %p165 = pneg %p159
    %p166 = scmp.eq.s32.totalorder %s14, 1
    %p167 = por %p165, %p166
    %p168 = scmp.ne.s32.totalorder %s160, %s163
    %p169 = scmp.eq.s32.totalorder %s14, 0
    %p170 = por %p168, %p169
    %p171 = scmp.ne.s32.totalorder %s160, %s163
    %p172 = scmp.eq.s32.totalorder %s19, 1
    %p173 = por %p171, %p172
    %p174 = scmp.ne.s32.totalorder %s163, %s164
    %p175 = scmp.eq.s32.totalorder %s19, 0
    %p176 = por %p174, %p175
    %p177 = scmp.ne.s32.totalorder %s163, %s164
    %p178 = scmp.eq.s32.totalorder %s20, 1
    %p179 = por %p177, %p178
    %p181 = scmp.ne.s32.totalorder %s164, %s180
    %p182 = scmp.eq.s32.totalorder %s20, 0
    %p183 = por %p181, %p182
    %s184 = ssub.s32 %s14, %s21
    %p185 = scmp.eq.s32.totalorder %s184, 0
    %s187 = sadd.s32 %s186, 1
    %s188 = scalar_select %p185, %s186, %s187
    %p191 = pneg %p185
    %p192 = scmp.eq.s32.totalorder %s14, 1
    %p193 = por %p191, %p192
    %p194 = scmp.ne.s32.totalorder %s186, %s189
    %p195 = scmp.eq.s32.totalorder %s14, 0
    %p196 = por %p194, %p195
    %p197 = scmp.ne.s32.totalorder %s186, %s189
    %p198 = scmp.eq.s32.totalorder %s19, 1
    %p199 = por %p197, %p198
    %p200 = scmp.ne.s32.totalorder %s189, %s190
    %p201 = scmp.eq.s32.totalorder %s19, 0
    %p202 = por %p200, %p201
    %p203 = scmp.ne.s32.totalorder %s189, %s190
    %p204 = scmp.eq.s32.totalorder %s20, 1
    %p205 = por %p203, %p204
    %p207 = scmp.ne.s32.totalorder %s190, %s206
    %p208 = scmp.eq.s32.totalorder %s20, 0
    %p209 = por %p207, %p208
    %p210 = scmp.le.s32.totalorder 1, %s14
    %p211 = scmp.lt.s32.totalorder %s14, 3
    %p212 = pnand %p210, %p211
    %p213 = pneg %p212
    // Predicated region
    $region9: #{actor_forward.1} parent=5 // pred_check
      _
    $region10: #{actor_forward.1} parent=5 // pred_check_branch
      %215 = sbr.rel (%p212) target = $region12
    $region11: #{actor_forward.1} parent=5 // pred_region
      %s216 = ssub.s32 %s14, 1
      // Predicated region
      $region13: #{actor_forward.1} parent=11 // pred_check
        %p217 = pneg %p61
      $region14: #{actor_forward.1} parent=11 // pred_check_branch
        %219 = sbr.rel (%p217) target = $region16
      $region15: #{actor_forward.1} parent=11 // pred_region
        _
      $region16: #{actor_forward.1} parent=11 // pred_fallthru
        _
      // Predicated region
      $region17: #{actor_forward.1} parent=11 // pred_check
        %p220 = pneg %p82
      $region18: #{actor_forward.1} parent=11 // pred_check_branch
        %222 = sbr.rel (%p220) target = $region20
      $region19: #{actor_forward.1} parent=11 // pred_region
        _
      $region20: #{actor_forward.1} parent=11 // pred_fallthru
        _
      // Predicated region
      $region21: #{actor_forward.1} parent=11 // pred_check
        %p223 = pneg %p103
      $region22: #{actor_forward.1} parent=11 // pred_check_branch
        %225 = sbr.rel (%p223) target = $region24
      $region23: #{actor_forward.1} parent=11 // pred_region
        _
      $region24: #{actor_forward.1} parent=11 // pred_fallthru
        _
      // Predicated region
      $region25: #{actor_forward.1} parent=11 // pred_check
        %p226 = pneg %p124
      $region26: #{actor_forward.1} parent=11 // pred_check_branch
        %228 = sbr.rel (%p226) target = $region28
      $region27: #{actor_forward.1} parent=11 // pred_region
        _
      $region28: #{actor_forward.1} parent=11 // pred_fallthru
        _
    $region12: #{actor_forward.1} parent=5 // pred_fallthru
      _
    %p229 = scmp.lt.s32.totalorder %s14, 2
    // Predicated region
    $region29: #{actor_forward.1} parent=5 // pred_check
      %p230 = pneg %p229
    $region30: #{actor_forward.1} parent=5 // pred_check_branch
      %232 = sbr.rel (%p230) target = $region32
    $region31: #{actor_forward.1} parent=5 // pred_region
      // Predicated region
      $region33: #{actor_forward.1} parent=31 // pred_check
        %p233 = pneg %p34
      $region34: #{actor_forward.1} parent=31 // pred_check_branch
        %235 = sbr.rel (%p233) target = $region36
      $region35: #{actor_forward.1} parent=31 // pred_region
        %s236 = smul.u32 16, %s14
        %p237 = scmp.lt.s32.totalorder %s236, 31
        %s238 = scalar_select %p237, %s236, 31
        %s239 = smul.addr %s238, 8
        %s240 = scalar_lea.vmem %s0, %s239
        %s241 = smul.u32 16, %s14
      $region36: #{actor_forward.1} parent=31 // pred_fallthru
        _
      // Predicated region
      $region37: #{actor_forward.1} parent=31 // pred_check
        %p242 = pneg %p144
      $region38: #{actor_forward.1} parent=31 // pred_check_branch
        %244 = sbr.rel (%p242) target = $region40
      $region39: #{actor_forward.1} parent=31 // pred_region
        %s245 = smul.u32 16, %s14
        %p246 = scmp.lt.s32.totalorder %s245, 31
        %s247 = scalar_select %p246, %s245, 31
        %s248 = smul.addr %s247, 8
        %s249 = scalar_lea.vmem %s5, %s248
        %s250 = smul.u32 16, %s14
      $region40: #{actor_forward.1} parent=31 // pred_fallthru
        _
    $region32: #{actor_forward.1} parent=5 // pred_fallthru
      _
    %p251 = scmp.le.s32.totalorder 1, %s14
    %p252 = scmp.lt.s32.totalorder %s14, 3
    %p253 = pnand %p251, %p252
    %p254 = pneg %p253
    // Predicated region
    $region41: #{actor_forward.1} parent=5 // pred_check
      _
    $region42: #{actor_forward.1} parent=5 // pred_check_branch
      %256 = sbr.rel (%p253) target = $region44
    $region43: #{actor_forward.1} parent=5 // pred_region
      %s257 = ssub.s32 %s14, 1
      %s258 = smul.u32 16, %s19
      %p259 = scmp.lt.s32.totalorder %s258, 31
      %s260 = scalar_select %p259, %s258, 31
      %s261 = smul.addr %s260, 8
      %s262 = scalar_lea.vmem %s0, %s261
      %p263 = pneg %p40
      %p264 = pneg %p37
      %p265 = pneg %p61
      %p266 = pneg %p58
      %p267 = pneg %p82
      %p268 = pneg %p79
      %p269 = pneg %p103
      %p270 = pneg %p100
      %p271 = pneg %p124
      %p272 = pneg %p121
      %s273 = smul.u32 16, %s19
      %p274 = scmp.lt.s32.totalorder %s273, 31
      %s275 = scalar_select %p274, %s273, 31
      %s276 = smul.addr %s275, 8
      %s277 = scalar_lea.vmem %s5, %s276
      %p278 = pneg %p150
      %p279 = pneg %p147
      %p280 = pneg %p176
      %p281 = pneg %p173
      %s282 = smul.u32 16, %s19
      %p283 = scmp.lt.s32.totalorder %s282, 31
      %s284 = scalar_select %p283, %s282, 31
      %s285 = smul.addr %s284, 8
      %s286 = scalar_lea.vmem %s6, %s285
      %p287 = pneg %p202
      %p288 = pneg %p199
      %s289 = smul.u32 16, %s19
      %p290 = scmp.lt.s32.totalorder %s289, 31
      %s291 = scalar_select %p290, %s289, 31
      %s292 = smul.addr %s291, 8
      %s293 = scalar_lea.vmem %s7, %s292
      %s294 = smul.u32 16, %s19
      %p295 = scmp.lt.s32.totalorder %s294, 31
      %s296 = scalar_select %p295, %s294, 31
      %s297 = smul.addr %s296, 8
      %s298 = scalar_lea.vmem %s0, %s297
      %s299 = smul.u32 16, %s19
      %s300 = smul.u32 16, %s19
      %p301 = scmp.lt.s32.totalorder %s300, 31
      %s302 = scalar_select %p301, %s300, 31
      %s303 = smul.addr %s302, 8
      %s304 = scalar_lea.vmem %s5, %s303
      %s305 = smul.u32 16, %s19
      %s306 = smul.u32 16, %s19
      %p307 = scmp.lt.s32.totalorder %s306, 31
      %s308 = scalar_select %p307, %s306, 31
      %s309 = smul.addr %s308, 8
      %s310 = scalar_lea.vmem %s6, %s309
      %s311 = smul.u32 16, %s19
      %s312 = smul.u32 16, %s19
      %p313 = scmp.lt.s32.totalorder %s312, 31
      %s314 = scalar_select %p313, %s312, 31
      %s315 = smul.addr %s314, 8
      %s316 = scalar_lea.vmem %s7, %s315
      %s317 = smul.u32 16, %s19
      %v318 = vld [vmem:[%s4] sm:$0x1f]
      %v319 = vld [vmem:[%s298] sm:$0xff]
      %v320 = vld [vmem:[%s298 + $0x8] sm:$0xff]
      %v321 = vld [vmem:[%s298 + $0x10] sm:$0xff]
      %v322 = vld [vmem:[%s298 + $0x18] sm:$0xff]
      %v323 = vld [vmem:[%s298 + $0x20] sm:$0xff]
      %v324 = vld [vmem:[%s298 + $0x28] sm:$0xff]
      %v325 = vld [vmem:[%s298 + $0x30] sm:$0xff]
      %v326 = vld [vmem:[%s298 + $0x38] sm:$0xff]
      %v327 = vld [vmem:[%s298 + $0x40] sm:$0xff]
      %v328 = vld [vmem:[%s298 + $0x48] sm:$0xff]
      %v329 = vld [vmem:[%s298 + $0x50] sm:$0xff]
      %v330 = vld [vmem:[%s298 + $0x58] sm:$0xff]
      %v331 = vld [vmem:[%s298 + $0x60] sm:$0xff]
      %v332 = vld [vmem:[%s298 + $0x68] sm:$0xff]
      %v333 = vld [vmem:[%s298 + $0x70] sm:$0xff]
      %v334 = vld [vmem:[%s298 + $0x78] sm:$0xff]
      %v335 = vld [vmem:[%s1] sm:$0xff]
      %v336 = vld [vmem:[%s1 + $0x8] sm:$0xff]
      %v337 = vlaneseq
      %v338 = vshrl.u32 %v337, 7
      %v339 = vsub.s32 0, %v338
      %v340 = vrot.slane %v318, %v339
      %vm341 = vcmask 130048
      %v343 = vsel %vm341, %v319, 0
      %v346 = vsel %vm341, %v320, 0
      %v349 = vsel %vm341, %v321, 0
      %v352 = vsel %vm341, %v322, 0
      %v355 = vsel %vm341, %v323, 0
      %v358 = vsel %vm341, %v324, 0
      %v361 = vsel %vm341, %v325, 0
      %v364 = vsel %vm341, %v326, 0
      %v367 = vsel %vm341, %v327, 0
      %v370 = vsel %vm341, %v328, 0
      %v373 = vsel %vm341, %v329, 0
      %v376 = vsel %vm341, %v330, 0
      %v379 = vsel %vm341, %v331, 0
      %v382 = vsel %vm341, %v332, 0
      %v385 = vsel %vm341, %v333, 0
      %v388 = vsel %vm341, %v334, 0
      %390 = vmatprep.subr.mxu0 0.0
      %391 = vmatpush1.msra.mxu0 %v335
      %392 = vmatprep.subr.mxu0 0.0
      %393 = vmatpush1.msra.mxu0 %v336
      %394 = vmatprep.subr.mxu0 0.0
      %395 = vmatpush1.msra.mxu0 0.0
      %396 = vmatprep.subr.mxu0 0.0
      %397 = vmatpush1.msra.mxu0 0.0
      %398 = vmatprep.subr.mxu0 0.0
      %399 = vmatpush1.msra.mxu0 0.0
      %400 = vmatprep.subr.mxu0 0.0
      %401 = vmatpush1.msra.mxu0 0.0
      %402 = vmatprep.subr.mxu0 0.0
      %403 = vmatpush1.msra.mxu0 0.0
      %404 = vmatprep.subr.mxu0 0.0
      %405 = vmatpush1.msra.mxu0 0.0
      %406 = vmatprep.subr.mxu0 0.0
      %407 = vmatpush1.msra.mxu0 0.0
      %408 = vmatprep.subr.mxu0 0.0
      %409 = vmatpush1.msra.mxu0 0.0
      %410 = vmatprep.subr.mxu0 0.0
      %411 = vmatpush1.msra.mxu0 0.0
      %412 = vmatprep.subr.mxu0 0.0
      %413 = vmatpush1.msra.mxu0 0.0
      %414 = vmatprep.subr.mxu0 0.0
      %415 = vmatpush1.msra.mxu0 0.0
      %416 = vmatprep.subr.mxu0 0.0
      %417 = vmatpush1.msra.mxu0 0.0
      %418 = vmatprep.subr.mxu0 0.0
      %419 = vmatpush1.msra.mxu0 0.0
      %420 = vmatprep.subr.mxu0 0.0
      %421 = vmatpush1.msra.mxu0 0.0
      %422 = vmatprep.subr.mxu0 0.0
      %423 = vmatpush1.msra.mxu0 0.0
      %424 = vmatprep.subr.mxu0 0.0
      %425 = vmatpush1.msra.mxu0 0.0
      %426 = vmatprep.subr.mxu0 0.0
      %427 = vmatpush1.msra.mxu0 0.0
      %428 = vmatprep.subr.mxu0 0.0
      %429 = vmatpush1.msra.mxu0 0.0
      %430 = vmatprep.subr.mxu0 0.0
      %431 = vmatpush1.msra.mxu0 0.0
      %432 = vmatprep.subr.mxu0 0.0
      %433 = vmatpush1.msra.mxu0 0.0
      %434 = vmatprep.subr.mxu0 0.0
      %435 = vmatpush1.msra.mxu0 0.0
      %436 = vmatprep.subr.mxu0 0.0
      %437 = vmatpush1.msra.mxu0 0.0
      %438 = vmatprep.subr.mxu0 0.0
      %439 = vmatpush1.msra.mxu0 0.0
      %440 = vmatprep.subr.mxu0 0.0
      %441 = vmatpush1.msra.mxu0 0.0
      %442 = vmatprep.subr.mxu0 0.0
      %443 = vmatpush1.msra.mxu0 0.0
      %444 = vmatprep.subr.mxu0 0.0
      %445 = vmatpush1.msra.mxu0 0.0
      %446 = vmatprep.subr.mxu0 0.0
      %447 = vmatpush1.msra.mxu0 0.0
      %448 = vmatprep.subr.mxu0 0.0
      %449 = vmatpush1.msra.mxu0 0.0
      %450 = vmatprep.subr.mxu0 0.0
      %451 = vmatpush1.msra.mxu0 0.0
      %452 = vmatprep.subr.mxu0 0.0
      %453 = vmatpush1.msra.mxu0 0.0
      %454 = vmatprep.mubr.f32.mxu0 0.0
      %455 = vmatmul.mubr.f32.gmra.mrb[0].mxu0 %v343
      %v456 = vpop.f32.mrb[0].mxu0
      %v457 = vadd.f32 %v340, %v456
      %v458 = vpop.f32.mrb[0].mxu0
      %459 = vmatprep.mubr.f32.mxu0 0.0
      %460 = vmatmul.mubr.f32.gmra.mrb[0].mxu0 %v346
      %v461 = vpop.f32.mrb[0].mxu0
      %v462 = vadd.f32 %v340, %v461
      %v463 = vpop.f32.mrb[0].mxu0
      %464 = vmatprep.mubr.f32.mxu0 0.0
      %465 = vmatmul.mubr.f32.gmra.mrb[0].mxu0 %v349
      %v466 = vpop.f32.mrb[0].mxu0
      %v467 = vadd.f32 %v340, %v466
      %v468 = vpop.f32.mrb[0].mxu0
      %469 = vmatprep.mubr.f32.mxu0 0.0
      %470 = vmatmul.mubr.f32.gmra.mrb[0].mxu0 %v352
      %v471 = vpop.f32.mrb[0].mxu0
      %v472 = vadd.f32 %v340, %v471
      %v473 = vpop.f32.mrb[0].mxu0
      %474 = vmatprep.mubr.f32.mxu0 0.0
      %475 = vmatmul.mubr.f32.gmra.mrb[0].mxu0 %v355
      %v476 = vpop.f32.mrb[0].mxu0
      %v477 = vadd.f32 %v340, %v476
      %v478 = vpop.f32.mrb[0].mxu0
      %479 = vmatprep.mubr.f32.mxu0 0.0
      %480 = vmatmul.mubr.f32.gmra.mrb[0].mxu0 %v358
      %v481 = vpop.f32.mrb[0].mxu0
      %v482 = vadd.f32 %v340, %v481
      %v483 = vpop.f32.mrb[0].mxu0
      %484 = vmatprep.mubr.f32.mxu0 0.0
      %485 = vmatmul.mubr.f32.gmra.mrb[0].mxu0 %v361
      %v486 = vpop.f32.mrb[0].mxu0
      %v487 = vadd.f32 %v340, %v486
      %v488 = vpop.f32.mrb[0].mxu0
      %489 = vmatprep.mubr.f32.mxu0 0.0
      %490 = vmatmul.mubr.f32.gmra.mrb[0].mxu0 %v364
      %v491 = vpop.f32.mrb[0].mxu0
      %v492 = vadd.f32 %v340, %v491
      %v493 = vpop.f32.mrb[0].mxu0
      %494 = vmatprep.mubr.f32.mxu0 0.0
      %495 = vmatmul.mubr.f32.gmra.mrb[0].mxu0 %v367
      %v496 = vpop.f32.mrb[0].mxu0
      %v497 = vadd.f32 %v340, %v496
      %v498 = vpop.f32.mrb[0].mxu0
      %499 = vmatprep.mubr.f32.mxu0 0.0
      %500 = vmatmul.mubr.f32.gmra.mrb[0].mxu0 %v370
      %v501 = vpop.f32.mrb[0].mxu0
      %v502 = vadd.f32 %v340, %v501
      %v503 = vpop.f32.mrb[0].mxu0
      %504 = vmatprep.mubr.f32.mxu0 0.0
      %505 = vmatmul.mubr.f32.gmra.mrb[0].mxu0 %v373
      %v506 = vpop.f32.mrb[0].mxu0
      %v507 = vadd.f32 %v340, %v506
      %v508 = vpop.f32.mrb[0].mxu0
      %509 = vmatprep.mubr.f32.mxu0 0.0
      %510 = vmatmul.mubr.f32.gmra.mrb[0].mxu0 %v376
      %v511 = vpop.f32.mrb[0].mxu0
      %v512 = vadd.f32 %v340, %v511
      %v513 = vpop.f32.mrb[0].mxu0
      %514 = vmatprep.mubr.f32.mxu0 0.0
      %515 = vmatmul.mubr.f32.gmra.mrb[0].mxu0 %v379
      %v516 = vpop.f32.mrb[0].mxu0
      %v517 = vadd.f32 %v340, %v516
      %v518 = vpop.f32.mrb[0].mxu0
      %519 = vmatprep.mubr.f32.mxu0 0.0
      %520 = vmatmul.mubr.f32.gmra.mrb[0].mxu0 %v382
      %v521 = vpop.f32.mrb[0].mxu0
      %v522 = vadd.f32 %v340, %v521
      %v523 = vpop.f32.mrb[0].mxu0
      %524 = vmatprep.mubr.f32.mxu0 0.0
      %525 = vmatmul.mubr.f32.gmra.mrb[0].mxu0 %v385
      %v526 = vpop.f32.mrb[0].mxu0
      %v527 = vadd.f32 %v340, %v526
      %v528 = vpop.f32.mrb[0].mxu0
      %529 = vmatprep.mubr.f32.mxu0 0.0
      %530 = vmatmul.mubr.f32.gmra.mrb[0].mxu0 %v388
      %v531 = vpop.f32.mrb[0].mxu0
      %v532 = vadd.f32 %v340, %v531
      %v533 = vpop.f32.mrb[0].mxu0
      %534 = vdwg.mxu0
      %v535 = vmax.f32 %v457, 0.0
      %v536 = vmax.f32 %v462, 0.0
      %v537 = vmax.f32 %v467, 0.0
      %v538 = vmax.f32 %v472, 0.0
      %v539 = vmax.f32 %v477, 0.0
      %v540 = vmax.f32 %v482, 0.0
      %v541 = vmax.f32 %v487, 0.0
      %v542 = vmax.f32 %v492, 0.0
      %v543 = vmax.f32 %v497, 0.0
      %v544 = vmax.f32 %v502, 0.0
      %v545 = vmax.f32 %v507, 0.0
      %v546 = vmax.f32 %v512, 0.0
      %v547 = vmax.f32 %v517, 0.0
      %v548 = vmax.f32 %v522, 0.0
      %v549 = vmax.f32 %v527, 0.0
      %v550 = vmax.f32 %v532, 0.0
      %v551 = vld [vmem:[%s2] sm:$0xff]
      %v552 = vld [vmem:[%s2 + $0x8] sm:$0xff]
      %v553 = vld [vmem:[%s2 + $0x10] sm:$0xff]
      %v554 = vld [vmem:[%s2 + $0x18] sm:$0xff]
      %v555 = vlaneseq
      %v556 = vshrl.u32 %v555, 7
      %v557 = vsub.s32 1, %v556
      %v558 = vrot.slane %v318, %v557
      %vm559 = vcmask 261120
      %v561 = vsel %vm559, %v535, 0
      %v564 = vsel %vm559, %v536, 0
      %v567 = vsel %vm559, %v537, 0
      %v570 = vsel %vm559, %v538, 0
      %v573 = vsel %vm559, %v539, 0
      %v576 = vsel %vm559, %v540, 0
      %v579 = vsel %vm559, %v541, 0
      %v582 = vsel %vm559, %v542, 0
      %v585 = vsel %vm559, %v543, 0
      %v588 = vsel %vm559, %v544, 0
      %v591 = vsel %vm559, %v545, 0
      %v594 = vsel %vm559, %v546, 0
      %v597 = vsel %vm559, %v547, 0
      %v600 = vsel %vm559, %v548, 0
      %v603 = vsel %vm559, %v549, 0
      %v606 = vsel %vm559, %v550, 0
      %608 = vmatprep.subr.mxu0 0.0
      %609 = vmatpush1.msra.mxu0 %v551
      %610 = vmatprep.subr.mxu0 0.0
      %611 = vmatpush1.msra.mxu0 %v552
      %612 = vmatprep.subr.mxu0 0.0
      %613 = vmatpush1.msra.mxu0 %v553
      %614 = vmatprep.subr.mxu0 0.0
      %615 = vmatpush1.msra.mxu0 %v554
      %616 = vmatprep.subr.mxu0 0.0
      %617 = vmatpush1.msra.mxu0 0.0
      %618 = vmatprep.subr.mxu0 0.0
      %619 = vmatpush1.msra.mxu0 0.0
      %620 = vmatprep.subr.mxu0 0.0
      %621 = vmatpush1.msra.mxu0 0.0
      %622 = vmatprep.subr.mxu0 0.0
      %623 = vmatpush1.msra.mxu0 0.0
      %624 = vmatprep.subr.mxu0 0.0
      %625 = vmatpush1.msra.mxu0 0.0
      %626 = vmatprep.subr.mxu0 0.0
      %627 = vmatpush1.msra.mxu0 0.0
      %628 = vmatprep.subr.mxu0 0.0
      %629 = vmatpush1.msra.mxu0 0.0
      %630 = vmatprep.subr.mxu0 0.0
      %631 = vmatpush1.msra.mxu0 0.0
      %632 = vmatprep.subr.mxu0 0.0
      %633 = vmatpush1.msra.mxu0 0.0
      %634 = vmatprep.subr.mxu0 0.0
      %635 = vmatpush1.msra.mxu0 0.0
      %636 = vmatprep.subr.mxu0 0.0
      %637 = vmatpush1.msra.mxu0 0.0
      %638 = vmatprep.subr.mxu0 0.0
      %639 = vmatpush1.msra.mxu0 0.0
      %640 = vmatprep.subr.mxu0 0.0
      %641 = vmatpush1.msra.mxu0 0.0
      %642 = vmatprep.subr.mxu0 0.0
      %643 = vmatpush1.msra.mxu0 0.0
      %644 = vmatprep.subr.mxu0 0.0
      %645 = vmatpush1.msra.mxu0 0.0
      %646 = vmatprep.subr.mxu0 0.0
      %647 = vmatpush1.msra.mxu0 0.0
      %648 = vmatprep.subr.mxu0 0.0
      %649 = vmatpush1.msra.mxu0 0.0
      %650 = vmatprep.subr.mxu0 0.0
      %651 = vmatpush1.msra.mxu0 0.0
      %652 = vmatprep.subr.mxu0 0.0
      %653 = vmatpush1.msra.mxu0 0.0
      %654 = vmatprep.subr.mxu0 0.0
      %655 = vmatpush1.msra.mxu0 0.0
      %656 = vmatprep.subr.mxu0 0.0
      %657 = vmatpush1.msra.mxu0 0.0
      %658 = vmatprep.subr.mxu0 0.0
      %659 = vmatpush1.msra.mxu0 0.0
      %660 = vmatprep.subr.mxu0 0.0
      %661 = vmatpush1.msra.mxu0 0.0
      %662 = vmatprep.subr.mxu0 0.0
      %663 = vmatpush1.msra.mxu0 0.0
      %664 = vmatprep.subr.mxu0 0.0
      %665 = vmatpush1.msra.mxu0 0.0
      %666 = vmatprep.subr.mxu0 0.0
      %667 = vmatpush1.msra.mxu0 0.0
      %668 = vmatprep.subr.mxu0 0.0
      %669 = vmatpush1.msra.mxu0 0.0
      %670 = vmatprep.subr.mxu0 0.0
      %671 = vmatpush1.msra.mxu0 0.0
      %672 = vmatprep.mubr.f32.mxu0 0.0
      %673 = vmatmul.mubr.f32.gmra.mrb[0].mxu0 %v561
      %v674 = vpop.f32.mrb[0].mxu0
      %v675 = vadd.f32 %v558, %v674
      %v676 = vpop.f32.mrb[0].mxu0
      %677 = vmatprep.mubr.f32.mxu0 0.0
      %678 = vmatmul.mubr.f32.gmra.mrb[0].mxu0 %v564
      %v679 = vpop.f32.mrb[0].mxu0
      %v680 = vadd.f32 %v558, %v679
      %v681 = vpop.f32.mrb[0].mxu0
      %682 = vmatprep.mubr.f32.mxu0 0.0
      %683 = vmatmul.mubr.f32.gmra.mrb[0].mxu0 %v567
      %v684 = vpop.f32.mrb[0].mxu0
      %v685 = vadd.f32 %v558, %v684
      %v686 = vpop.f32.mrb[0].mxu0
      %687 = vmatprep.mubr.f32.mxu0 0.0
      %688 = vmatmul.mubr.f32.gmra.mrb[0].mxu0 %v570
      %v689 = vpop.f32.mrb[0].mxu0
      %v690 = vadd.f32 %v558, %v689
      %v691 = vpop.f32.mrb[0].mxu0
      %692 = vmatprep.mubr.f32.mxu0 0.0
      %693 = vmatmul.mubr.f32.gmra.mrb[0].mxu0 %v573
      %v694 = vpop.f32.mrb[0].mxu0
      %v695 = vadd.f32 %v558, %v694
      %v696 = vpop.f32.mrb[0].mxu0
      %697 = vmatprep.mubr.f32.mxu0 0.0
      %698 = vmatmul.mubr.f32.gmra.mrb[0].mxu0 %v576
      %v699 = vpop.f32.mrb[0].mxu0
      %v700 = vadd.f32 %v558, %v699
      %v701 = vpop.f32.mrb[0].mxu0
      %702 = vmatprep.mubr.f32.mxu0 0.0
      %703 = vmatmul.mubr.f32.gmra.mrb[0].mxu0 %v579
      %v704 = vpop.f32.mrb[0].mxu0
      %v705 = vadd.f32 %v558, %v704
      %v706 = vpop.f32.mrb[0].mxu0
      %707 = vmatprep.mubr.f32.mxu0 0.0
      %708 = vmatmul.mubr.f32.gmra.mrb[0].mxu0 %v582
      %v709 = vpop.f32.mrb[0].mxu0
      %v710 = vadd.f32 %v558, %v709
      %v711 = vpop.f32.mrb[0].mxu0
      %712 = vmatprep.mubr.f32.mxu0 0.0
      %713 = vmatmul.mubr.f32.gmra.mrb[0].mxu0 %v585
      %v714 = vpop.f32.mrb[0].mxu0
      %v715 = vadd.f32 %v558, %v714
      %v716 = vpop.f32.mrb[0].mxu0
      %717 = vmatprep.mubr.f32.mxu0 0.0
      %718 = vmatmul.mubr.f32.gmra.mrb[0].mxu0 %v588
      %v719 = vpop.f32.mrb[0].mxu0
      %v720 = vadd.f32 %v558, %v719
      %v721 = vpop.f32.mrb[0].mxu0
      %722 = vmatprep.mubr.f32.mxu0 0.0
      %723 = vmatmul.mubr.f32.gmra.mrb[0].mxu0 %v591
      %v724 = vpop.f32.mrb[0].mxu0
      %v725 = vadd.f32 %v558, %v724
      %v726 = vpop.f32.mrb[0].mxu0
      %727 = vmatprep.mubr.f32.mxu0 0.0
      %728 = vmatmul.mubr.f32.gmra.mrb[0].mxu0 %v594
      %v729 = vpop.f32.mrb[0].mxu0
      %v730 = vadd.f32 %v558, %v729
      %v731 = vpop.f32.mrb[0].mxu0
      %732 = vmatprep.mubr.f32.mxu0 0.0
      %733 = vmatmul.mubr.f32.gmra.mrb[0].mxu0 %v597
      %v734 = vpop.f32.mrb[0].mxu0
      %v735 = vadd.f32 %v558, %v734
      %v736 = vpop.f32.mrb[0].mxu0
      %737 = vmatprep.mubr.f32.mxu0 0.0
      %738 = vmatmul.mubr.f32.gmra.mrb[0].mxu0 %v600
      %v739 = vpop.f32.mrb[0].mxu0
      %v740 = vadd.f32 %v558, %v739
      %v741 = vpop.f32.mrb[0].mxu0
      %742 = vmatprep.mubr.f32.mxu0 0.0
      %743 = vmatmul.mubr.f32.gmra.mrb[0].mxu0 %v603
      %v744 = vpop.f32.mrb[0].mxu0
      %v745 = vadd.f32 %v558, %v744
      %v746 = vpop.f32.mrb[0].mxu0
      %747 = vmatprep.mubr.f32.mxu0 0.0
      %748 = vmatmul.mubr.f32.gmra.mrb[0].mxu0 %v606
      %v749 = vpop.f32.mrb[0].mxu0
      %v750 = vadd.f32 %v558, %v749
      %v751 = vpop.f32.mrb[0].mxu0
      %752 = vdwg.mxu0
      %v753 = vmax.f32 %v675, 0.0
      %v754 = vmax.f32 %v680, 0.0
      %v755 = vmax.f32 %v685, 0.0
      %v756 = vmax.f32 %v690, 0.0
      %v757 = vmax.f32 %v695, 0.0
      %v758 = vmax.f32 %v700, 0.0
      %v759 = vmax.f32 %v705, 0.0
      %v760 = vmax.f32 %v710, 0.0
      %v761 = vmax.f32 %v715, 0.0
      %v762 = vmax.f32 %v720, 0.0
      %v763 = vmax.f32 %v725, 0.0
      %v764 = vmax.f32 %v730, 0.0
      %v765 = vmax.f32 %v735, 0.0
      %v766 = vmax.f32 %v740, 0.0
      %v767 = vmax.f32 %v745, 0.0
      %v768 = vmax.f32 %v750, 0.0
      %s769 = scalar_lea.vmem %s2, 32
      %v770 = vld [vmem:[%s769] sm:$0xff]
      %v771 = vld [vmem:[%s769 + $0x8] sm:$0xff]
      %v772 = vld [vmem:[%s769 + $0x10] sm:$0xff]
      %v773 = vld [vmem:[%s769 + $0x18] sm:$0xff]
      %v774 = vlaneseq
      %v775 = vshrl.u32 %v774, 7
      %v776 = vsub.s32 2, %v775
      %v777 = vrot.slane %v318, %v776
      %v779 = vsel %vm559, %v753, 0
      %v782 = vsel %vm559, %v754, 0
      %v785 = vsel %vm559, %v755, 0
      %v788 = vsel %vm559, %v756, 0
      %v791 = vsel %vm559, %v757, 0
      %v794 = vsel %vm559, %v758, 0
      %v797 = vsel %vm559, %v759, 0
      %v800 = vsel %vm559, %v760, 0
      %v803 = vsel %vm559, %v761, 0
      %v806 = vsel %vm559, %v762, 0
      %v809 = vsel %vm559, %v763, 0
      %v812 = vsel %vm559, %v764, 0
      %v815 = vsel %vm559, %v765, 0
      %v818 = vsel %vm559, %v766, 0
      %v821 = vsel %vm559, %v767, 0
      %v824 = vsel %vm559, %v768, 0
      %826 = vmatprep.subr.mxu0 0.0
      %827 = vmatpush1.msra.mxu0 %v770
      %828 = vmatprep.subr.mxu0 0.0
      %829 = vmatpush1.msra.mxu0 %v771
      %830 = vmatprep.subr.mxu0 0.0
      %831 = vmatpush1.msra.mxu0 %v772
      %832 = vmatprep.subr.mxu0 0.0
      %833 = vmatpush1.msra.mxu0 %v773
      %834 = vmatprep.subr.mxu0 0.0
      %835 = vmatpush1.msra.mxu0 0.0
      %836 = vmatprep.subr.mxu0 0.0
      %837 = vmatpush1.msra.mxu0 0.0
      %838 = vmatprep.subr.mxu0 0.0
      %839 = vmatpush1.msra.mxu0 0.0
      %840 = vmatprep.subr.mxu0 0.0
      %841 = vmatpush1.msra.mxu0 0.0
      %842 = vmatprep.subr.mxu0 0.0
      %843 = vmatpush1.msra.mxu0 0.0
      %844 = vmatprep.subr.mxu0 0.0
      %845 = vmatpush1.msra.mxu0 0.0
      %846 = vmatprep.subr.mxu0 0.0
      %847 = vmatpush1.msra.mxu0 0.0
      %848 = vmatprep.subr.mxu0 0.0
      %849 = vmatpush1.msra.mxu0 0.0
      %850 = vmatprep.subr.mxu0 0.0
      %851 = vmatpush1.msra.mxu0 0.0
      %852 = vmatprep.subr.mxu0 0.0
      %853 = vmatpush1.msra.mxu0 0.0
      %854 = vmatprep.subr.mxu0 0.0
      %855 = vmatpush1.msra.mxu0 0.0
      %856 = vmatprep.subr.mxu0 0.0
      %857 = vmatpush1.msra.mxu0 0.0
      %858 = vmatprep.subr.mxu0 0.0
      %859 = vmatpush1.msra.mxu0 0.0
      %860 = vmatprep.subr.mxu0 0.0
      %861 = vmatpush1.msra.mxu0 0.0
      %862 = vmatprep.subr.mxu0 0.0
      %863 = vmatpush1.msra.mxu0 0.0
      %864 = vmatprep.subr.mxu0 0.0
      %865 = vmatpush1.msra.mxu0 0.0
      %866 = vmatprep.subr.mxu0 0.0
      %867 = vmatpush1.msra.mxu0 0.0
      %868 = vmatprep.subr.mxu0 0.0
      %869 = vmatpush1.msra.mxu0 0.0
      %870 = vmatprep.subr.mxu0 0.0
      %871 = vmatpush1.msra.mxu0 0.0
      %872 = vmatprep.subr.mxu0 0.0
      %873 = vmatpush1.msra.mxu0 0.0
      %874 = vmatprep.subr.mxu0 0.0
      %875 = vmatpush1.msra.mxu0 0.0
      %876 = vmatprep.subr.mxu0 0.0
      %877 = vmatpush1.msra.mxu0 0.0
      %878 = vmatprep.subr.mxu0 0.0
      %879 = vmatpush1.msra.mxu0 0.0
      %880 = vmatprep.subr.mxu0 0.0
      %881 = vmatpush1.msra.mxu0 0.0
      %882 = vmatprep.subr.mxu0 0.0
      %883 = vmatpush1.msra.mxu0 0.0
      %884 = vmatprep.subr.mxu0 0.0
      %885 = vmatpush1.msra.mxu0 0.0
      %886 = vmatprep.subr.mxu0 0.0
      %887 = vmatpush1.msra.mxu0 0.0
      %888 = vmatprep.subr.mxu0 0.0
      %889 = vmatpush1.msra.mxu0 0.0
      %890 = vmatprep.mubr.f32.mxu0 0.0
      %891 = vmatmul.mubr.f32.gmra.mrb[0].mxu0 %v779
      %v892 = vpop.f32.mrb[0].mxu0
      %v893 = vadd.f32 %v777, %v892
      %v894 = vpop.f32.mrb[0].mxu0
      %895 = vmatprep.mubr.f32.mxu0 0.0
      %896 = vmatmul.mubr.f32.gmra.mrb[0].mxu0 %v782
      %v897 = vpop.f32.mrb[0].mxu0
      %v898 = vadd.f32 %v777, %v897
      %v899 = vpop.f32.mrb[0].mxu0
      %900 = vmatprep.mubr.f32.mxu0 0.0
      %901 = vmatmul.mubr.f32.gmra.mrb[0].mxu0 %v785
      %v902 = vpop.f32.mrb[0].mxu0
      %v903 = vadd.f32 %v777, %v902
      %v904 = vpop.f32.mrb[0].mxu0
      %905 = vmatprep.mubr.f32.mxu0 0.0
      %906 = vmatmul.mubr.f32.gmra.mrb[0].mxu0 %v788
      %v907 = vpop.f32.mrb[0].mxu0
      %v908 = vadd.f32 %v777, %v907
      %v909 = vpop.f32.mrb[0].mxu0
      %910 = vmatprep.mubr.f32.mxu0 0.0
      %911 = vmatmul.mubr.f32.gmra.mrb[0].mxu0 %v791
      %v912 = vpop.f32.mrb[0].mxu0
      %v913 = vadd.f32 %v777, %v912
      %v914 = vpop.f32.mrb[0].mxu0
      %915 = vmatprep.mubr.f32.mxu0 0.0
      %916 = vmatmul.mubr.f32.gmra.mrb[0].mxu0 %v794
      %v917 = vpop.f32.mrb[0].mxu0
      %v918 = vadd.f32 %v777, %v917
      %v919 = vpop.f32.mrb[0].mxu0
      %920 = vmatprep.mubr.f32.mxu0 0.0
      %921 = vmatmul.mubr.f32.gmra.mrb[0].mxu0 %v797
      %v922 = vpop.f32.mrb[0].mxu0
      %v923 = vadd.f32 %v777, %v922
      %v924 = vpop.f32.mrb[0].mxu0
      %925 = vmatprep.mubr.f32.mxu0 0.0
      %926 = vmatmul.mubr.f32.gmra.mrb[0].mxu0 %v800
      %v927 = vpop.f32.mrb[0].mxu0
      %v928 = vadd.f32 %v777, %v927
      %v929 = vpop.f32.mrb[0].mxu0
      %930 = vmatprep.mubr.f32.mxu0 0.0
      %931 = vmatmul.mubr.f32.gmra.mrb[0].mxu0 %v803
      %v932 = vpop.f32.mrb[0].mxu0
      %v933 = vadd.f32 %v777, %v932
      %v934 = vpop.f32.mrb[0].mxu0
      %935 = vmatprep.mubr.f32.mxu0 0.0
      %936 = vmatmul.mubr.f32.gmra.mrb[0].mxu0 %v806
      %v937 = vpop.f32.mrb[0].mxu0
      %v938 = vadd.f32 %v777, %v937
      %v939 = vpop.f32.mrb[0].mxu0
      %940 = vmatprep.mubr.f32.mxu0 0.0
      %941 = vmatmul.mubr.f32.gmra.mrb[0].mxu0 %v809
      %v942 = vpop.f32.mrb[0].mxu0
      %v943 = vadd.f32 %v777, %v942
      %v944 = vpop.f32.mrb[0].mxu0
      %945 = vmatprep.mubr.f32.mxu0 0.0
      %946 = vmatmul.mubr.f32.gmra.mrb[0].mxu0 %v812
      %v947 = vpop.f32.mrb[0].mxu0
      %v948 = vadd.f32 %v777, %v947
      %v949 = vpop.f32.mrb[0].mxu0
      %950 = vmatprep.mubr.f32.mxu0 0.0
      %951 = vmatmul.mubr.f32.gmra.mrb[0].mxu0 %v815
      %v952 = vpop.f32.mrb[0].mxu0
      %v953 = vadd.f32 %v777, %v952
      %v954 = vpop.f32.mrb[0].mxu0
      %955 = vmatprep.mubr.f32.mxu0 0.0
      %956 = vmatmul.mubr.f32.gmra.mrb[0].mxu0 %v818
      %v957 = vpop.f32.mrb[0].mxu0
      %v958 = vadd.f32 %v777, %v957
      %v959 = vpop.f32.mrb[0].mxu0
      %960 = vmatprep.mubr.f32.mxu0 0.0
      %961 = vmatmul.mubr.f32.gmra.mrb[0].mxu0 %v821
      %v962 = vpop.f32.mrb[0].mxu0
      %v963 = vadd.f32 %v777, %v962
      %v964 = vpop.f32.mrb[0].mxu0
      %965 = vmatprep.mubr.f32.mxu0 0.0
      %966 = vmatmul.mubr.f32.gmra.mrb[0].mxu0 %v824
      %v967 = vpop.f32.mrb[0].mxu0
      %v968 = vadd.f32 %v777, %v967
      %v969 = vpop.f32.mrb[0].mxu0
      %970 = vdwg.mxu0
      %v971 = vmax.f32 %v893, 0.0
      %v972 = vmax.f32 %v898, 0.0
      %v973 = vmax.f32 %v903, 0.0
      %v974 = vmax.f32 %v908, 0.0
      %v975 = vmax.f32 %v913, 0.0
      %v976 = vmax.f32 %v918, 0.0
      %v977 = vmax.f32 %v923, 0.0
      %v978 = vmax.f32 %v928, 0.0
      %v979 = vmax.f32 %v933, 0.0
      %v980 = vmax.f32 %v938, 0.0
      %v981 = vmax.f32 %v943, 0.0
      %v982 = vmax.f32 %v948, 0.0
      %v983 = vmax.f32 %v953, 0.0
      %v984 = vmax.f32 %v958, 0.0
      %v985 = vmax.f32 %v963, 0.0
      %v986 = vmax.f32 %v968, 0.0
      %s987 = scalar_lea.vmem %s2, 64
      %v988 = vld [vmem:[%s987] sm:$0xff]
      %v989 = vld [vmem:[%s987 + $0x8] sm:$0xff]
      %v990 = vld [vmem:[%s987 + $0x10] sm:$0xff]
      %v991 = vld [vmem:[%s987 + $0x18] sm:$0xff]
      %v992 = vlaneseq
      %v993 = vshrl.u32 %v992, 7
      %v994 = vsub.s32 3, %v993
      %v995 = vrot.slane %v318, %v994
      %v997 = vsel %vm559, %v971, 0
      %v1000 = vsel %vm559, %v972, 0
      %v1003 = vsel %vm559, %v973, 0
      %v1006 = vsel %vm559, %v974, 0
      %v1009 = vsel %vm559, %v975, 0
      %v1012 = vsel %vm559, %v976, 0
      %v1015 = vsel %vm559, %v977, 0
      %v1018 = vsel %vm559, %v978, 0
      %v1021 = vsel %vm559, %v979, 0
      %v1024 = vsel %vm559, %v980, 0
      %v1027 = vsel %vm559, %v981, 0
      %v1030 = vsel %vm559, %v982, 0
      %v1033 = vsel %vm559, %v983, 0
      %v1036 = vsel %vm559, %v984, 0
      %v1039 = vsel %vm559, %v985, 0
      %v1042 = vsel %vm559, %v986, 0
      %1044 = vmatprep.subr.mxu0 0.0
      %1045 = vmatpush1.msra.mxu0 %v988
      %1046 = vmatprep.subr.mxu0 0.0
      %1047 = vmatpush1.msra.mxu0 %v989
      %1048 = vmatprep.subr.mxu0 0.0
      %1049 = vmatpush1.msra.mxu0 %v990
      %1050 = vmatprep.subr.mxu0 0.0
      %1051 = vmatpush1.msra.mxu0 %v991
      %1052 = vmatprep.subr.mxu0 0.0
      %1053 = vmatpush1.msra.mxu0 0.0
      %1054 = vmatprep.subr.mxu0 0.0
      %1055 = vmatpush1.msra.mxu0 0.0
      %1056 = vmatprep.subr.mxu0 0.0
      %1057 = vmatpush1.msra.mxu0 0.0
      %1058 = vmatprep.subr.mxu0 0.0
      %1059 = vmatpush1.msra.mxu0 0.0
      %1060 = vmatprep.subr.mxu0 0.0
      %1061 = vmatpush1.msra.mxu0 0.0
      %1062 = vmatprep.subr.mxu0 0.0
      %1063 = vmatpush1.msra.mxu0 0.0
      %1064 = vmatprep.subr.mxu0 0.0
      %1065 = vmatpush1.msra.mxu0 0.0
      %1066 = vmatprep.subr.mxu0 0.0
      %1067 = vmatpush1.msra.mxu0 0.0
      %1068 = vmatprep.subr.mxu0 0.0
      %1069 = vmatpush1.msra.mxu0 0.0
      %1070 = vmatprep.subr.mxu0 0.0
      %1071 = vmatpush1.msra.mxu0 0.0
      %1072 = vmatprep.subr.mxu0 0.0
      %1073 = vmatpush1.msra.mxu0 0.0
      %1074 = vmatprep.subr.mxu0 0.0
      %1075 = vmatpush1.msra.mxu0 0.0
      %1076 = vmatprep.subr.mxu0 0.0
      %1077 = vmatpush1.msra.mxu0 0.0
      %1078 = vmatprep.subr.mxu0 0.0
      %1079 = vmatpush1.msra.mxu0 0.0
      %1080 = vmatprep.subr.mxu0 0.0
      %1081 = vmatpush1.msra.mxu0 0.0
      %1082 = vmatprep.subr.mxu0 0.0
      %1083 = vmatpush1.msra.mxu0 0.0
      %1084 = vmatprep.subr.mxu0 0.0
      %1085 = vmatpush1.msra.mxu0 0.0
      %1086 = vmatprep.subr.mxu0 0.0
      %1087 = vmatpush1.msra.mxu0 0.0
      %1088 = vmatprep.subr.mxu0 0.0
      %1089 = vmatpush1.msra.mxu0 0.0
      %1090 = vmatprep.subr.mxu0 0.0
      %1091 = vmatpush1.msra.mxu0 0.0
      %1092 = vmatprep.subr.mxu0 0.0
      %1093 = vmatpush1.msra.mxu0 0.0
      %1094 = vmatprep.subr.mxu0 0.0
      %1095 = vmatpush1.msra.mxu0 0.0
      %1096 = vmatprep.subr.mxu0 0.0
      %1097 = vmatpush1.msra.mxu0 0.0
      %1098 = vmatprep.subr.mxu0 0.0
      %1099 = vmatpush1.msra.mxu0 0.0
      %1100 = vmatprep.subr.mxu0 0.0
      %1101 = vmatpush1.msra.mxu0 0.0
      %1102 = vmatprep.subr.mxu0 0.0
      %1103 = vmatpush1.msra.mxu0 0.0
      %1104 = vmatprep.subr.mxu0 0.0
      %1105 = vmatpush1.msra.mxu0 0.0
      %1106 = vmatprep.subr.mxu0 0.0
      %1107 = vmatpush1.msra.mxu0 0.0
      %1108 = vmatprep.mubr.f32.mxu0 0.0
      %1109 = vmatmul.mubr.f32.gmra.mrb[0].mxu0 %v997
      %v1110 = vpop.f32.mrb[0].mxu0
      %v1111 = vadd.f32 %v995, %v1110
      %v1112 = vpop.f32.mrb[0].mxu0
      %1113 = vmatprep.mubr.f32.mxu0 0.0
      %1114 = vmatmul.mubr.f32.gmra.mrb[0].mxu0 %v1000
      %v1115 = vpop.f32.mrb[0].mxu0
      %v1116 = vadd.f32 %v995, %v1115
      %v1117 = vpop.f32.mrb[0].mxu0
      %1118 = vmatprep.mubr.f32.mxu0 0.0
      %1119 = vmatmul.mubr.f32.gmra.mrb[0].mxu0 %v1003
      %v1120 = vpop.f32.mrb[0].mxu0
      %v1121 = vadd.f32 %v995, %v1120
      %v1122 = vpop.f32.mrb[0].mxu0
      %1123 = vmatprep.mubr.f32.mxu0 0.0
      %1124 = vmatmul.mubr.f32.gmra.mrb[0].mxu0 %v1006
      %v1125 = vpop.f32.mrb[0].mxu0
      %v1126 = vadd.f32 %v995, %v1125
      %v1127 = vpop.f32.mrb[0].mxu0
      %1128 = vmatprep.mubr.f32.mxu0 0.0
      %1129 = vmatmul.mubr.f32.gmra.mrb[0].mxu0 %v1009
      %v1130 = vpop.f32.mrb[0].mxu0
      %v1131 = vadd.f32 %v995, %v1130
      %v1132 = vpop.f32.mrb[0].mxu0
      %1133 = vmatprep.mubr.f32.mxu0 0.0
      %1134 = vmatmul.mubr.f32.gmra.mrb[0].mxu0 %v1012
      %v1135 = vpop.f32.mrb[0].mxu0
      %v1136 = vadd.f32 %v995, %v1135
      %v1137 = vpop.f32.mrb[0].mxu0
      %1138 = vmatprep.mubr.f32.mxu0 0.0
      %1139 = vmatmul.mubr.f32.gmra.mrb[0].mxu0 %v1015
      %v1140 = vpop.f32.mrb[0].mxu0
      %v1141 = vadd.f32 %v995, %v1140
      %v1142 = vpop.f32.mrb[0].mxu0
      %1143 = vmatprep.mubr.f32.mxu0 0.0
      %1144 = vmatmul.mubr.f32.gmra.mrb[0].mxu0 %v1018
      %v1145 = vpop.f32.mrb[0].mxu0
      %v1146 = vadd.f32 %v995, %v1145
      %v1147 = vpop.f32.mrb[0].mxu0
      %1148 = vmatprep.mubr.f32.mxu0 0.0
      %1149 = vmatmul.mubr.f32.gmra.mrb[0].mxu0 %v1021
      %v1150 = vpop.f32.mrb[0].mxu0
      %v1151 = vadd.f32 %v995, %v1150
      %v1152 = vpop.f32.mrb[0].mxu0
      %1153 = vmatprep.mubr.f32.mxu0 0.0
      %1154 = vmatmul.mubr.f32.gmra.mrb[0].mxu0 %v1024
      %v1155 = vpop.f32.mrb[0].mxu0
      %v1156 = vadd.f32 %v995, %v1155
      %v1157 = vpop.f32.mrb[0].mxu0
      %1158 = vmatprep.mubr.f32.mxu0 0.0
      %1159 = vmatmul.mubr.f32.gmra.mrb[0].mxu0 %v1027
      %v1160 = vpop.f32.mrb[0].mxu0
      %v1161 = vadd.f32 %v995, %v1160
      %v1162 = vpop.f32.mrb[0].mxu0
      %1163 = vmatprep.mubr.f32.mxu0 0.0
      %1164 = vmatmul.mubr.f32.gmra.mrb[0].mxu0 %v1030
      %v1165 = vpop.f32.mrb[0].mxu0
      %v1166 = vadd.f32 %v995, %v1165
      %v1167 = vpop.f32.mrb[0].mxu0
      %1168 = vmatprep.mubr.f32.mxu0 0.0
      %1169 = vmatmul.mubr.f32.gmra.mrb[0].mxu0 %v1033
      %v1170 = vpop.f32.mrb[0].mxu0
      %v1171 = vadd.f32 %v995, %v1170
      %v1172 = vpop.f32.mrb[0].mxu0
      %1173 = vmatprep.mubr.f32.mxu0 0.0
      %1174 = vmatmul.mubr.f32.gmra.mrb[0].mxu0 %v1036
      %v1175 = vpop.f32.mrb[0].mxu0
      %v1176 = vadd.f32 %v995, %v1175
      %v1177 = vpop.f32.mrb[0].mxu0
      %1178 = vmatprep.mubr.f32.mxu0 0.0
      %1179 = vmatmul.mubr.f32.gmra.mrb[0].mxu0 %v1039
      %v1180 = vpop.f32.mrb[0].mxu0
      %v1181 = vadd.f32 %v995, %v1180
      %v1182 = vpop.f32.mrb[0].mxu0
      %1183 = vmatprep.mubr.f32.mxu0 0.0
      %1184 = vmatmul.mubr.f32.gmra.mrb[0].mxu0 %v1042
      %v1185 = vpop.f32.mrb[0].mxu0
      %v1186 = vadd.f32 %v995, %v1185
      %v1187 = vpop.f32.mrb[0].mxu0
      %1188 = vdwg.mxu0
      %v1189 = vmax.f32 %v1111, 0.0
      %v1190 = vmax.f32 %v1116, 0.0
      %v1191 = vmax.f32 %v1121, 0.0
      %v1192 = vmax.f32 %v1126, 0.0
      %v1193 = vmax.f32 %v1131, 0.0
      %v1194 = vmax.f32 %v1136, 0.0
      %v1195 = vmax.f32 %v1141, 0.0
      %v1196 = vmax.f32 %v1146, 0.0
      %v1197 = vmax.f32 %v1151, 0.0
      %v1198 = vmax.f32 %v1156, 0.0
      %v1199 = vmax.f32 %v1161, 0.0
      %v1200 = vmax.f32 %v1166, 0.0
      %v1201 = vmax.f32 %v1171, 0.0
      %v1202 = vmax.f32 %v1176, 0.0
      %v1203 = vmax.f32 %v1181, 0.0
      %v1204 = vmax.f32 %v1186, 0.0
      %v1205 = vld [vmem:[%s3] sm:$0xff]
      %v1206 = vld [vmem:[%s3 + $0x8] sm:$0xff]
      %v1207 = vld [vmem:[%s3 + $0x10] sm:$0xff]
      %v1208 = vld [vmem:[%s3 + $0x18] sm:$0xff]
      %v1209 = vlaneseq
      %v1210 = vshrl.u32 %v1209, 7
      %v1211 = vsub.s32 4, %v1210
      %v1212 = vrot.slane %v318, %v1211
      %v1214 = vsel %vm559, %v1189, 0
      %v1217 = vsel %vm559, %v1190, 0
      %v1220 = vsel %vm559, %v1191, 0
      %v1223 = vsel %vm559, %v1192, 0
      %v1226 = vsel %vm559, %v1193, 0
      %v1229 = vsel %vm559, %v1194, 0
      %v1232 = vsel %vm559, %v1195, 0
      %v1235 = vsel %vm559, %v1196, 0
      %v1238 = vsel %vm559, %v1197, 0
      %v1241 = vsel %vm559, %v1198, 0
      %v1244 = vsel %vm559, %v1199, 0
      %v1247 = vsel %vm559, %v1200, 0
      %v1250 = vsel %vm559, %v1201, 0
      %v1253 = vsel %vm559, %v1202, 0
      %v1256 = vsel %vm559, %v1203, 0
      %v1259 = vsel %vm559, %v1204, 0
      %1261 = vmatprep.subr.mxu0 0.0
      %1262 = vmatpush1.msra.mxu0 %v1205
      %1263 = vmatprep.subr.mxu0 0.0
      %1264 = vmatpush1.msra.mxu0 %v1206
      %1265 = vmatprep.subr.mxu0 0.0
      %1266 = vmatpush1.msra.mxu0 %v1207
      %1267 = vmatprep.subr.mxu0 0.0
      %1268 = vmatpush1.msra.mxu0 %v1208
      %1269 = vmatprep.subr.mxu0 0.0
      %1270 = vmatpush1.msra.mxu0 0.0
      %1271 = vmatprep.subr.mxu0 0.0
      %1272 = vmatpush1.msra.mxu0 0.0
      %1273 = vmatprep.subr.mxu0 0.0
      %1274 = vmatpush1.msra.mxu0 0.0
      %1275 = vmatprep.subr.mxu0 0.0
      %1276 = vmatpush1.msra.mxu0 0.0
      %1277 = vmatprep.subr.mxu0 0.0
      %1278 = vmatpush1.msra.mxu0 0.0
      %1279 = vmatprep.subr.mxu0 0.0
      %1280 = vmatpush1.msra.mxu0 0.0
      %1281 = vmatprep.subr.mxu0 0.0
      %1282 = vmatpush1.msra.mxu0 0.0
      %1283 = vmatprep.subr.mxu0 0.0
      %1284 = vmatpush1.msra.mxu0 0.0
      %1285 = vmatprep.subr.mxu0 0.0
      %1286 = vmatpush1.msra.mxu0 0.0
      %1287 = vmatprep.subr.mxu0 0.0
      %1288 = vmatpush1.msra.mxu0 0.0
      %1289 = vmatprep.subr.mxu0 0.0
      %1290 = vmatpush1.msra.mxu0 0.0
      %1291 = vmatprep.subr.mxu0 0.0
      %1292 = vmatpush1.msra.mxu0 0.0
      %1293 = vmatprep.subr.mxu0 0.0
      %1294 = vmatpush1.msra.mxu0 0.0
      %1295 = vmatprep.subr.mxu0 0.0
      %1296 = vmatpush1.msra.mxu0 0.0
      %1297 = vmatprep.subr.mxu0 0.0
      %1298 = vmatpush1.msra.mxu0 0.0
      %1299 = vmatprep.subr.mxu0 0.0
      %1300 = vmatpush1.msra.mxu0 0.0
      %1301 = vmatprep.subr.mxu0 0.0
      %1302 = vmatpush1.msra.mxu0 0.0
      %1303 = vmatprep.subr.mxu0 0.0
      %1304 = vmatpush1.msra.mxu0 0.0
      %1305 = vmatprep.subr.mxu0 0.0
      %1306 = vmatpush1.msra.mxu0 0.0
      %1307 = vmatprep.subr.mxu0 0.0
      %1308 = vmatpush1.msra.mxu0 0.0
      %1309 = vmatprep.subr.mxu0 0.0
      %1310 = vmatpush1.msra.mxu0 0.0
      %1311 = vmatprep.subr.mxu0 0.0
      %1312 = vmatpush1.msra.mxu0 0.0
      %1313 = vmatprep.subr.mxu0 0.0
      %1314 = vmatpush1.msra.mxu0 0.0
      %1315 = vmatprep.subr.mxu0 0.0
      %1316 = vmatpush1.msra.mxu0 0.0
      %1317 = vmatprep.subr.mxu0 0.0
      %1318 = vmatpush1.msra.mxu0 0.0
      %1319 = vmatprep.subr.mxu0 0.0
      %1320 = vmatpush1.msra.mxu0 0.0
      %1321 = vmatprep.subr.mxu0 0.0
      %1322 = vmatpush1.msra.mxu0 0.0
      %1323 = vmatprep.subr.mxu0 0.0
      %1324 = vmatpush1.msra.mxu0 0.0
      %1325 = vmatprep.mubr.f32.mxu0 0.0
      %1326 = vmatmul.mubr.f32.gmra.mrb[0].mxu0 %v1214
      %v1327 = vpop.f32.mrb[0].mxu0
      %v1328 = vadd.f32 %v1212, %v1327
      %v1329 = vpop.f32.mrb[0].mxu0
      %1330 = vmatprep.mubr.f32.mxu0 0.0
      %1331 = vmatmul.mubr.f32.gmra.mrb[0].mxu0 %v1217
      %v1332 = vpop.f32.mrb[0].mxu0
      %v1333 = vadd.f32 %v1212, %v1332
      %v1334 = vpop.f32.mrb[0].mxu0
      %1335 = vmatprep.mubr.f32.mxu0 0.0
      %1336 = vmatmul.mubr.f32.gmra.mrb[0].mxu0 %v1220
      %v1337 = vpop.f32.mrb[0].mxu0
      %v1338 = vadd.f32 %v1212, %v1337
      %v1339 = vpop.f32.mrb[0].mxu0
      %1340 = vmatprep.mubr.f32.mxu0 0.0
      %1341 = vmatmul.mubr.f32.gmra.mrb[0].mxu0 %v1223
      %v1342 = vpop.f32.mrb[0].mxu0
      %v1343 = vadd.f32 %v1212, %v1342
      %v1344 = vpop.f32.mrb[0].mxu0
      %1345 = vmatprep.mubr.f32.mxu0 0.0
      %1346 = vmatmul.mubr.f32.gmra.mrb[0].mxu0 %v1226
      %v1347 = vpop.f32.mrb[0].mxu0
      %v1348 = vadd.f32 %v1212, %v1347
      %v1349 = vpop.f32.mrb[0].mxu0
      %1350 = vmatprep.mubr.f32.mxu0 0.0
      %1351 = vmatmul.mubr.f32.gmra.mrb[0].mxu0 %v1229
      %v1352 = vpop.f32.mrb[0].mxu0
      %v1353 = vadd.f32 %v1212, %v1352
      %v1354 = vpop.f32.mrb[0].mxu0
      %1355 = vmatprep.mubr.f32.mxu0 0.0
      %1356 = vmatmul.mubr.f32.gmra.mrb[0].mxu0 %v1232
      %v1357 = vpop.f32.mrb[0].mxu0
      %v1358 = vadd.f32 %v1212, %v1357
      %v1359 = vpop.f32.mrb[0].mxu0
      %1360 = vmatprep.mubr.f32.mxu0 0.0
      %1361 = vmatmul.mubr.f32.gmra.mrb[0].mxu0 %v1235
      %v1362 = vpop.f32.mrb[0].mxu0
      %v1363 = vadd.f32 %v1212, %v1362
      %v1364 = vpop.f32.mrb[0].mxu0
      %1365 = vmatprep.mubr.f32.mxu0 0.0
      %1366 = vmatmul.mubr.f32.gmra.mrb[0].mxu0 %v1238
      %v1367 = vpop.f32.mrb[0].mxu0
      %v1368 = vadd.f32 %v1212, %v1367
      %v1369 = vpop.f32.mrb[0].mxu0
      %1370 = vmatprep.mubr.f32.mxu0 0.0
      %1371 = vmatmul.mubr.f32.gmra.mrb[0].mxu0 %v1241
      %v1372 = vpop.f32.mrb[0].mxu0
      %v1373 = vadd.f32 %v1212, %v1372
      %v1374 = vpop.f32.mrb[0].mxu0
      %1375 = vmatprep.mubr.f32.mxu0 0.0
      %1376 = vmatmul.mubr.f32.gmra.mrb[0].mxu0 %v1244
      %v1377 = vpop.f32.mrb[0].mxu0
      %v1378 = vadd.f32 %v1212, %v1377
      %v1379 = vpop.f32.mrb[0].mxu0
      %1380 = vmatprep.mubr.f32.mxu0 0.0
      %1381 = vmatmul.mubr.f32.gmra.mrb[0].mxu0 %v1247
      %v1382 = vpop.f32.mrb[0].mxu0
      %v1383 = vadd.f32 %v1212, %v1382
      %v1384 = vpop.f32.mrb[0].mxu0
      %1385 = vmatprep.mubr.f32.mxu0 0.0
      %1386 = vmatmul.mubr.f32.gmra.mrb[0].mxu0 %v1250
      %v1387 = vpop.f32.mrb[0].mxu0
      %v1388 = vadd.f32 %v1212, %v1387
      %v1389 = vpop.f32.mrb[0].mxu0
      %1390 = vmatprep.mubr.f32.mxu0 0.0
      %1391 = vmatmul.mubr.f32.gmra.mrb[0].mxu0 %v1253
      %v1392 = vpop.f32.mrb[0].mxu0
      %v1393 = vadd.f32 %v1212, %v1392
      %v1394 = vpop.f32.mrb[0].mxu0
      %1395 = vmatprep.mubr.f32.mxu0 0.0
      %1396 = vmatmul.mubr.f32.gmra.mrb[0].mxu0 %v1256
      %v1397 = vpop.f32.mrb[0].mxu0
      %v1398 = vadd.f32 %v1212, %v1397
      %v1399 = vpop.f32.mrb[0].mxu0
      %1400 = vmatprep.mubr.f32.mxu0 0.0
      %1401 = vmatmul.mubr.f32.gmra.mrb[0].mxu0 %v1259
      %v1402 = vpop.f32.mrb[0].mxu0
      %v1403 = vadd.f32 %v1212, %v1402
      %v1404 = vpop.f32.mrb[0].mxu0
      %1405 = vdwg.mxu0
      %vm1406 = vcmask 64512
      %v1407 = vsel %vm1406, %v1328, -inf
      %1408 = vmax.xlane.f32.xlu0 %v1407
      %v1409 = vpop.xlane.xlu0 %1408
      %v1410 = vsel %vm1406, %v1333, -inf
      %1411 = vmax.xlane.f32.xlu0 %v1410
      %v1412 = vpop.xlane.xlu0 %1411
      %v1413 = vsel %vm1406, %v1338, -inf
      %1414 = vmax.xlane.f32.xlu0 %v1413
      %v1415 = vpop.xlane.xlu0 %1414
      %v1416 = vsel %vm1406, %v1343, -inf
      %1417 = vmax.xlane.f32.xlu0 %v1416
      %v1418 = vpop.xlane.xlu0 %1417
      %v1419 = vsel %vm1406, %v1348, -inf
      %1420 = vmax.xlane.f32.xlu0 %v1419
      %v1421 = vpop.xlane.xlu0 %1420
      %v1422 = vsel %vm1406, %v1353, -inf
      %1423 = vmax.xlane.f32.xlu0 %v1422
      %v1424 = vpop.xlane.xlu0 %1423
      %v1425 = vsel %vm1406, %v1358, -inf
      %1426 = vmax.xlane.f32.xlu0 %v1425
      %v1427 = vpop.xlane.xlu0 %1426
      %v1428 = vsel %vm1406, %v1363, -inf
      %1429 = vmax.xlane.f32.xlu0 %v1428
      %v1430 = vpop.xlane.xlu0 %1429
      %v1431 = vsel %vm1406, %v1368, -inf
      %1432 = vmax.xlane.f32.xlu0 %v1431
      %v1433 = vpop.xlane.xlu0 %1432
      %v1434 = vsel %vm1406, %v1373, -inf
      %1435 = vmax.xlane.f32.xlu0 %v1434
      %v1436 = vpop.xlane.xlu0 %1435
      %v1437 = vsel %vm1406, %v1378, -inf
      %1438 = vmax.xlane.f32.xlu0 %v1437
      %v1439 = vpop.xlane.xlu0 %1438
      %v1440 = vsel %vm1406, %v1383, -inf
      %1441 = vmax.xlane.f32.xlu0 %v1440
      %v1442 = vpop.xlane.xlu0 %1441
      %v1443 = vsel %vm1406, %v1388, -inf
      %1444 = vmax.xlane.f32.xlu0 %v1443
      %v1445 = vpop.xlane.xlu0 %1444
      %v1446 = vsel %vm1406, %v1393, -inf
      %1447 = vmax.xlane.f32.xlu0 %v1446
      %v1448 = vpop.xlane.xlu0 %1447
      %v1449 = vsel %vm1406, %v1398, -inf
      %1450 = vmax.xlane.f32.xlu0 %v1449
      %v1451 = vpop.xlane.xlu0 %1450
      %v1452 = vsel %vm1406, %v1403, -inf
      %1453 = vmax.xlane.f32.xlu0 %v1452
      %v1454 = vpop.xlane.xlu0 %1453
      %v1455 = vsub.f32 %v1328, %v1409
      %v1456 = vsub.f32 %v1333, %v1412
      %v1457 = vsub.f32 %v1338, %v1415
      %v1458 = vsub.f32 %v1343, %v1418
      %v1459 = vsub.f32 %v1348, %v1421
      %v1460 = vsub.f32 %v1353, %v1424
      %v1461 = vsub.f32 %v1358, %v1427
      %v1462 = vsub.f32 %v1363, %v1430
      %v1463 = vsub.f32 %v1368, %v1433
      %v1464 = vsub.f32 %v1373, %v1436
      %v1465 = vsub.f32 %v1378, %v1439
      %v1466 = vsub.f32 %v1383, %v1442
      %v1467 = vsub.f32 %v1388, %v1445
      %v1468 = vsub.f32 %v1393, %v1448
      %v1469 = vsub.f32 %v1398, %v1451
      %v1470 = vsub.f32 %v1403, %v1454
      %v1471 = vmul.f32 %v1455, 1.442695
      %v1472 = vpow.pop %v1471
      %v1473 = vmul.f32 %v1456, 1.442695
      %v1474 = vpow.pop %v1473
      %v1475 = vmul.f32 %v1457, 1.442695
      %v1476 = vpow.pop %v1475
      %v1477 = vmul.f32 %v1458, 1.442695
      %v1478 = vpow.pop %v1477
      %v1479 = vmul.f32 %v1459, 1.442695
      %v1480 = vpow.pop %v1479
      %v1481 = vmul.f32 %v1460, 1.442695
      %v1482 = vpow.pop %v1481
      %v1483 = vmul.f32 %v1461, 1.442695
      %v1484 = vpow.pop %v1483
      %v1485 = vmul.f32 %v1462, 1.442695
      %v1486 = vpow.pop %v1485
      %v1487 = vmul.f32 %v1463, 1.442695
      %v1488 = vpow.pop %v1487
      %v1489 = vmul.f32 %v1464, 1.442695
      %v1490 = vpow.pop %v1489
      %v1491 = vmul.f32 %v1465, 1.442695
      %v1492 = vpow.pop %v1491
      %v1493 = vmul.f32 %v1466, 1.442695
      %v1494 = vpow.pop %v1493
      %v1495 = vmul.f32 %v1467, 1.442695
      %v1496 = vpow.pop %v1495
      %v1497 = vmul.f32 %v1468, 1.442695
      %v1498 = vpow.pop %v1497
      %v1499 = vmul.f32 %v1469, 1.442695
      %v1500 = vpow.pop %v1499
      %v1501 = vmul.f32 %v1470, 1.442695
      %v1502 = vpow.pop %v1501
      %v1503 = vsel %vm1406, %v1472, 0.0
      %1504 = vadd.xlane.f32.xlu0 %v1503
      %v1505 = vpop.xlane.xlu0 %1504
      %v1506 = vsel %vm1406, %v1474, 0.0
      %1507 = vadd.xlane.f32.xlu0 %v1506
      %v1508 = vpop.xlane.xlu0 %1507
      %v1509 = vsel %vm1406, %v1476, 0.0
      %1510 = vadd.xlane.f32.xlu0 %v1509
      %v1511 = vpop.xlane.xlu0 %1510
      %v1512 = vsel %vm1406, %v1478, 0.0
      %1513 = vadd.xlane.f32.xlu0 %v1512
      %v1514 = vpop.xlane.xlu0 %1513
      %v1515 = vsel %vm1406, %v1480, 0.0
      %1516 = vadd.xlane.f32.xlu0 %v1515
      %v1517 = vpop.xlane.xlu0 %1516
      %v1518 = vsel %vm1406, %v1482, 0.0
      %1519 = vadd.xlane.f32.xlu0 %v1518
      %v1520 = vpop.xlane.xlu0 %1519
      %v1521 = vsel %vm1406, %v1484, 0.0
      %1522 = vadd.xlane.f32.xlu0 %v1521
      %v1523 = vpop.xlane.xlu0 %1522
      %v1524 = vsel %vm1406, %v1486, 0.0
      %1525 = vadd.xlane.f32.xlu0 %v1524
      %v1526 = vpop.xlane.xlu0 %1525
      %v1527 = vsel %vm1406, %v1488, 0.0
      %1528 = vadd.xlane.f32.xlu0 %v1527
      %v1529 = vpop.xlane.xlu0 %1528
      %v1530 = vsel %vm1406, %v1490, 0.0
      %1531 = vadd.xlane.f32.xlu0 %v1530
      %v1532 = vpop.xlane.xlu0 %1531
      %v1533 = vsel %vm1406, %v1492, 0.0
      %1534 = vadd.xlane.f32.xlu0 %v1533
      %v1535 = vpop.xlane.xlu0 %1534
      %v1536 = vsel %vm1406, %v1494, 0.0
      %1537 = vadd.xlane.f32.xlu0 %v1536
      %v1538 = vpop.xlane.xlu0 %1537
      %v1539 = vsel %vm1406, %v1496, 0.0
      %1540 = vadd.xlane.f32.xlu0 %v1539
      %v1541 = vpop.xlane.xlu0 %1540
      %v1542 = vsel %vm1406, %v1498, 0.0
      %1543 = vadd.xlane.f32.xlu0 %v1542
      %v1544 = vpop.xlane.xlu0 %1543
      %v1545 = vsel %vm1406, %v1500, 0.0
      %1546 = vadd.xlane.f32.xlu0 %v1545
      %v1547 = vpop.xlane.xlu0 %1546
      %v1548 = vsel %vm1406, %v1502, 0.0
      %1549 = vadd.xlane.f32.xlu0 %v1548
      %v1550 = vpop.xlane.xlu0 %1549
      %v1551 = vrcp.pop %v1505
      %v1552 = vmul.f32 %v1472, %v1551
      %v1553 = vrcp.pop %v1508
      %v1554 = vmul.f32 %v1474, %v1553
      %v1555 = vrcp.pop %v1511
      %v1556 = vmul.f32 %v1476, %v1555
      %v1557 = vrcp.pop %v1514
      %v1558 = vmul.f32 %v1478, %v1557
      %v1559 = vrcp.pop %v1517
      %v1560 = vmul.f32 %v1480, %v1559
      %v1561 = vrcp.pop %v1520
      %v1562 = vmul.f32 %v1482, %v1561
      %v1563 = vrcp.pop %v1523
      %v1564 = vmul.f32 %v1484, %v1563
      %v1565 = vrcp.pop %v1526
      %v1566 = vmul.f32 %v1486, %v1565
      %v1567 = vrcp.pop %v1529
      %v1568 = vmul.f32 %v1488, %v1567
      %v1569 = vrcp.pop %v1532
      %v1570 = vmul.f32 %v1490, %v1569
      %v1571 = vrcp.pop %v1535
      %v1572 = vmul.f32 %v1492, %v1571
      %v1573 = vrcp.pop %v1538
      %v1574 = vmul.f32 %v1494, %v1573
      %v1575 = vrcp.pop %v1541
      %v1576 = vmul.f32 %v1496, %v1575
      %v1577 = vrcp.pop %v1544
      %v1578 = vmul.f32 %v1498, %v1577
      %v1579 = vrcp.pop %v1547
      %v1580 = vmul.f32 %v1500, %v1579
      %v1581 = vrcp.pop %v1550
      %v1582 = vmul.f32 %v1502, %v1581
      %1583 = vst.msk [vmem:[%s310] sm:$0xff] %vm1406, %v1552
      %1584 = vst.msk [vmem:[%s310 + $0x8] sm:$0xff] %vm1406, %v1554
      %1585 = vst.msk [vmem:[%s310 + $0x10] sm:$0xff] %vm1406, %v1556
      %1586 = vst.msk [vmem:[%s310 + $0x18] sm:$0xff] %vm1406, %v1558
      %1587 = vst.msk [vmem:[%s310 + $0x20] sm:$0xff] %vm1406, %v1560
      %1588 = vst.msk [vmem:[%s310 + $0x28] sm:$0xff] %vm1406, %v1562
      %1589 = vst.msk [vmem:[%s310 + $0x30] sm:$0xff] %vm1406, %v1564
      %1590 = vst.msk [vmem:[%s310 + $0x38] sm:$0xff] %vm1406, %v1566
      %1591 = vst.msk [vmem:[%s310 + $0x40] sm:$0xff] %vm1406, %v1568
      %1592 = vst.msk [vmem:[%s310 + $0x48] sm:$0xff] %vm1406, %v1570
      %1593 = vst.msk [vmem:[%s310 + $0x50] sm:$0xff] %vm1406, %v1572
      %1594 = vst.msk [vmem:[%s310 + $0x58] sm:$0xff] %vm1406, %v1574
      %1595 = vst.msk [vmem:[%s310 + $0x60] sm:$0xff] %vm1406, %v1576
      %1596 = vst.msk [vmem:[%s310 + $0x68] sm:$0xff] %vm1406, %v1578
      %1597 = vst.msk [vmem:[%s310 + $0x70] sm:$0xff] %vm1406, %v1580
      %1598 = vst.msk [vmem:[%s310 + $0x78] sm:$0xff] %vm1406, %v1582
      %v1599 = vld [vmem:[%s304] sm:$0xff]
      %v1600 = vld [vmem:[%s304 + $0x8] sm:$0xff]
      %v1601 = vld [vmem:[%s304 + $0x10] sm:$0xff]
      %v1602 = vld [vmem:[%s304 + $0x18] sm:$0xff]
      %v1603 = vld [vmem:[%s304 + $0x20] sm:$0xff]
      %v1604 = vld [vmem:[%s304 + $0x28] sm:$0xff]
      %v1605 = vld [vmem:[%s304 + $0x30] sm:$0xff]
      %v1606 = vld [vmem:[%s304 + $0x38] sm:$0xff]
      %v1607 = vld [vmem:[%s304 + $0x40] sm:$0xff]
      %v1608 = vld [vmem:[%s304 + $0x48] sm:$0xff]
      %v1609 = vld [vmem:[%s304 + $0x50] sm:$0xff]
      %v1610 = vld [vmem:[%s304 + $0x58] sm:$0xff]
      %v1611 = vld [vmem:[%s304 + $0x60] sm:$0xff]
      %v1612 = vld [vmem:[%s304 + $0x68] sm:$0xff]
      %v1613 = vld [vmem:[%s304 + $0x70] sm:$0xff]
      %v1614 = vld [vmem:[%s304 + $0x78] sm:$0xff]
      %v1615 = vadd.f32 %v1455, %v1599
      %v1616 = vadd.f32 %v1456, %v1600
      %v1617 = vadd.f32 %v1457, %v1601
      %v1618 = vadd.f32 %v1458, %v1602
      %v1619 = vadd.f32 %v1459, %v1603
      %v1620 = vadd.f32 %v1460, %v1604
      %v1621 = vadd.f32 %v1461, %v1605
      %v1622 = vadd.f32 %v1462, %v1606
      %v1623 = vadd.f32 %v1463, %v1607
      %v1624 = vadd.f32 %v1464, %v1608
      %v1625 = vadd.f32 %v1465, %v1609
      %v1626 = vadd.f32 %v1466, %v1610
      %v1627 = vadd.f32 %v1467, %v1611
      %v1628 = vadd.f32 %v1468, %v1612
      %v1629 = vadd.f32 %v1469, %v1613
      %v1630 = vadd.f32 %v1470, %v1614
      %v1631 = vsel %vm1406, %v1615, -inf
      %1632 = vmax.xlane.f32.xlu0 %v1631
      %v1633 = vpop.xlane.xlu0 %1632
      %v1634 = vsel %vm1406, %v1616, -inf
      %1635 = vmax.xlane.f32.xlu0 %v1634
      %v1636 = vpop.xlane.xlu0 %1635
      %v1637 = vsel %vm1406, %v1617, -inf
      %1638 = vmax.xlane.f32.xlu0 %v1637
      %v1639 = vpop.xlane.xlu0 %1638
      %v1640 = vsel %vm1406, %v1618, -inf
      %1641 = vmax.xlane.f32.xlu0 %v1640
      %v1642 = vpop.xlane.xlu0 %1641
      %v1643 = vsel %vm1406, %v1619, -inf
      %1644 = vmax.xlane.f32.xlu0 %v1643
      %v1645 = vpop.xlane.xlu0 %1644
      %v1646 = vsel %vm1406, %v1620, -inf
      %1647 = vmax.xlane.f32.xlu0 %v1646
      %v1648 = vpop.xlane.xlu0 %1647
      %v1649 = vsel %vm1406, %v1621, -inf
      %1650 = vmax.xlane.f32.xlu0 %v1649
      %v1651 = vpop.xlane.xlu0 %1650
      %v1652 = vsel %vm1406, %v1622, -inf
      %1653 = vmax.xlane.f32.xlu0 %v1652
      %v1654 = vpop.xlane.xlu0 %1653
      %v1655 = vsel %vm1406, %v1623, -inf
      %1656 = vmax.xlane.f32.xlu0 %v1655
      %v1657 = vpop.xlane.xlu0 %1656
      %v1658 = vsel %vm1406, %v1624, -inf
      %1659 = vmax.xlane.f32.xlu0 %v1658
      %v1660 = vpop.xlane.xlu0 %1659
      %v1661 = vsel %vm1406, %v1625, -inf
      %1662 = vmax.xlane.f32.xlu0 %v1661
      %v1663 = vpop.xlane.xlu0 %1662
      %v1664 = vsel %vm1406, %v1626, -inf
      %1665 = vmax.xlane.f32.xlu0 %v1664
      %v1666 = vpop.xlane.xlu0 %1665
      %v1667 = vsel %vm1406, %v1627, -inf
      %1668 = vmax.xlane.f32.xlu0 %v1667
      %v1669 = vpop.xlane.xlu0 %1668
      %v1670 = vsel %vm1406, %v1628, -inf
      %1671 = vmax.xlane.f32.xlu0 %v1670
      %v1672 = vpop.xlane.xlu0 %1671
      %v1673 = vsel %vm1406, %v1629, -inf
      %1674 = vmax.xlane.f32.xlu0 %v1673
      %v1675 = vpop.xlane.xlu0 %1674
      %v1676 = vsel %vm1406, %v1630, -inf
      %1677 = vmax.xlane.f32.xlu0 %v1676
      %v1678 = vpop.xlane.xlu0 %1677
      %v1679 = vlaneseq
      %v1680 = vand.u32 %v1679, 127
      %vm1681 = vcmp.ge.f32.partialorder %v1615, %v1633
      %vm1682 = vcmp.ge.f32.partialorder %v1616, %v1636
      %vm1683 = vcmp.ge.f32.partialorder %v1617, %v1639
      %vm1684 = vcmp.ge.f32.partialorder %v1618, %v1642
      %vm1685 = vcmp.ge.f32.partialorder %v1619, %v1645
      %vm1686 = vcmp.ge.f32.partialorder %v1620, %v1648
      %vm1687 = vcmp.ge.f32.partialorder %v1621, %v1651
      %vm1688 = vcmp.ge.f32.partialorder %v1622, %v1654
      %vm1689 = vcmp.ge.f32.partialorder %v1623, %v1657
      %vm1690 = vcmp.ge.f32.partialorder %v1624, %v1660
      %vm1691 = vcmp.ge.f32.partialorder %v1625, %v1663
      %vm1692 = vcmp.ge.f32.partialorder %v1626, %v1666
      %vm1693 = vcmp.ge.f32.partialorder %v1627, %v1669
      %vm1694 = vcmp.ge.f32.partialorder %v1628, %v1672
      %vm1695 = vcmp.ge.f32.partialorder %v1629, %v1675
      %vm1696 = vcmp.ge.f32.partialorder %v1630, %v1678
      %v1697 = vsel %vm1681, %v1680, 8
      %v1698 = vsel %vm1682, %v1680, 8
      %v1699 = vsel %vm1683, %v1680, 8
      %v1700 = vsel %vm1684, %v1680, 8
      %v1701 = vsel %vm1685, %v1680, 8
      %v1702 = vsel %vm1686, %v1680, 8
      %v1703 = vsel %vm1687, %v1680, 8
      %v1704 = vsel %vm1688, %v1680, 8
      %v1705 = vsel %vm1689, %v1680, 8
      %v1706 = vsel %vm1690, %v1680, 8
      %v1707 = vsel %vm1691, %v1680, 8
      %v1708 = vsel %vm1692, %v1680, 8
      %v1709 = vsel %vm1693, %v1680, 8
      %v1710 = vsel %vm1694, %v1680, 8
      %v1711 = vsel %vm1695, %v1680, 8
      %v1712 = vsel %vm1696, %v1680, 8
      %v1713 = vsel %vm1406, %v1697, 2147483647
      %v1714 = vand.u32 %v1713, 65535
      %v1715 = vshra.s32 %v1713, 16
      %v1716 = vcvt.s32.f32 %v1714
      %v1717 = vcvt.s32.f32 %v1715
      %1718 = vmin.xlane.f32.xlu0 %v1717
      %v1719 = vpop.xlane.xlu0 %1718
      %vm1720 = vcmp.eq.f32.partialorder %v1717, %v1719
      %v1721 = vsel %vm1720, %v1716, inf
      %1722 = vmin.xlane.f32.xlu0 %v1721
      %v1723 = vpop.xlane.xlu0 %1722
      %v1724 = vcvt.f32.s32 %v1723
      %v1725 = vcvt.f32.s32 %v1719
      %v1726 = vshll.u32 %v1725, 16
      %v1727 = vadd.s32 %v1726, %v1724
      %v1728 = vsel %vm1406, %v1698, 2147483647
      %v1729 = vand.u32 %v1728, 65535
      %v1730 = vshra.s32 %v1728, 16
      %v1731 = vcvt.s32.f32 %v1729
      %v1732 = vcvt.s32.f32 %v1730
      %1733 = vmin.xlane.f32.xlu0 %v1732
      %v1734 = vpop.xlane.xlu0 %1733
      %vm1735 = vcmp.eq.f32.partialorder %v1732, %v1734
      %v1736 = vsel %vm1735, %v1731, inf
      %1737 = vmin.xlane.f32.xlu0 %v1736
      %v1738 = vpop.xlane.xlu0 %1737
      %v1739 = vcvt.f32.s32 %v1738
      %v1740 = vcvt.f32.s32 %v1734
      %v1741 = vshll.u32 %v1740, 16
      %v1742 = vadd.s32 %v1741, %v1739
      %v1743 = vsel %vm1406, %v1699, 2147483647
      %v1744 = vand.u32 %v1743, 65535
      %v1745 = vshra.s32 %v1743, 16
      %v1746 = vcvt.s32.f32 %v1744
      %v1747 = vcvt.s32.f32 %v1745
      %1748 = vmin.xlane.f32.xlu0 %v1747
      %v1749 = vpop.xlane.xlu0 %1748
      %vm1750 = vcmp.eq.f32.partialorder %v1747, %v1749
      %v1751 = vsel %vm1750, %v1746, inf
      %1752 = vmin.xlane.f32.xlu0 %v1751
      %v1753 = vpop.xlane.xlu0 %1752
      %v1754 = vcvt.f32.s32 %v1753
      %v1755 = vcvt.f32.s32 %v1749
      %v1756 = vshll.u32 %v1755, 16
      %v1757 = vadd.s32 %v1756, %v1754
      %v1758 = vsel %vm1406, %v1700, 2147483647
      %v1759 = vand.u32 %v1758, 65535
      %v1760 = vshra.s32 %v1758, 16
      %v1761 = vcvt.s32.f32 %v1759
      %v1762 = vcvt.s32.f32 %v1760
      %1763 = vmin.xlane.f32.xlu0 %v1762
      %v1764 = vpop.xlane.xlu0 %1763
      %vm1765 = vcmp.eq.f32.partialorder %v1762, %v1764
      %v1766 = vsel %vm1765, %v1761, inf
      %1767 = vmin.xlane.f32.xlu0 %v1766
      %v1768 = vpop.xlane.xlu0 %1767
      %v1769 = vcvt.f32.s32 %v1768
      %v1770 = vcvt.f32.s32 %v1764
      %v1771 = vshll.u32 %v1770, 16
      %v1772 = vadd.s32 %v1771, %v1769
      %v1773 = vsel %vm1406, %v1701, 2147483647
      %v1774 = vand.u32 %v1773, 65535
      %v1775 = vshra.s32 %v1773, 16
      %v1776 = vcvt.s32.f32 %v1774
      %v1777 = vcvt.s32.f32 %v1775
      %1778 = vmin.xlane.f32.xlu0 %v1777
      %v1779 = vpop.xlane.xlu0 %1778
      %vm1780 = vcmp.eq.f32.partialorder %v1777, %v1779
      %v1781 = vsel %vm1780, %v1776, inf
      %1782 = vmin.xlane.f32.xlu0 %v1781
      %v1783 = vpop.xlane.xlu0 %1782
      %v1784 = vcvt.f32.s32 %v1783
      %v1785 = vcvt.f32.s32 %v1779
      %v1786 = vshll.u32 %v1785, 16
      %v1787 = vadd.s32 %v1786, %v1784
      %v1788 = vsel %vm1406, %v1702, 2147483647
      %v1789 = vand.u32 %v1788, 65535
      %v1790 = vshra.s32 %v1788, 16
      %v1791 = vcvt.s32.f32 %v1789
      %v1792 = vcvt.s32.f32 %v1790
      %1793 = vmin.xlane.f32.xlu0 %v1792
      %v1794 = vpop.xlane.xlu0 %1793
      %vm1795 = vcmp.eq.f32.partialorder %v1792, %v1794
      %v1796 = vsel %vm1795, %v1791, inf
      %1797 = vmin.xlane.f32.xlu0 %v1796
      %v1798 = vpop.xlane.xlu0 %1797
      %v1799 = vcvt.f32.s32 %v1798
      %v1800 = vcvt.f32.s32 %v1794
      %v1801 = vshll.u32 %v1800, 16
      %v1802 = vadd.s32 %v1801, %v1799
      %v1803 = vsel %vm1406, %v1703, 2147483647
      %v1804 = vand.u32 %v1803, 65535
      %v1805 = vshra.s32 %v1803, 16
      %v1806 = vcvt.s32.f32 %v1804
      %v1807 = vcvt.s32.f32 %v1805
      %1808 = vmin.xlane.f32.xlu0 %v1807
      %v1809 = vpop.xlane.xlu0 %1808
      %vm1810 = vcmp.eq.f32.partialorder %v1807, %v1809
      %v1811 = vsel %vm1810, %v1806, inf
      %1812 = vmin.xlane.f32.xlu0 %v1811
      %v1813 = vpop.xlane.xlu0 %1812
      %v1814 = vcvt.f32.s32 %v1813
      %v1815 = vcvt.f32.s32 %v1809
      %v1816 = vshll.u32 %v1815, 16
      %v1817 = vadd.s32 %v1816, %v1814
      %v1818 = vsel %vm1406, %v1704, 2147483647
      %v1819 = vand.u32 %v1818, 65535
      %v1820 = vshra.s32 %v1818, 16
      %v1821 = vcvt.s32.f32 %v1819
      %v1822 = vcvt.s32.f32 %v1820
      %1823 = vmin.xlane.f32.xlu0 %v1822
      %v1824 = vpop.xlane.xlu0 %1823
      %vm1825 = vcmp.eq.f32.partialorder %v1822, %v1824
      %v1826 = vsel %vm1825, %v1821, inf
      %1827 = vmin.xlane.f32.xlu0 %v1826
      %v1828 = vpop.xlane.xlu0 %1827
      %v1829 = vcvt.f32.s32 %v1828
      %v1830 = vcvt.f32.s32 %v1824
      %v1831 = vshll.u32 %v1830, 16
      %v1832 = vadd.s32 %v1831, %v1829
      %v1833 = vsel %vm1406, %v1705, 2147483647
      %v1834 = vand.u32 %v1833, 65535
      %v1835 = vshra.s32 %v1833, 16
      %v1836 = vcvt.s32.f32 %v1834
      %v1837 = vcvt.s32.f32 %v1835
      %1838 = vmin.xlane.f32.xlu0 %v1837
      %v1839 = vpop.xlane.xlu0 %1838
      %vm1840 = vcmp.eq.f32.partialorder %v1837, %v1839
      %v1841 = vsel %vm1840, %v1836, inf
      %1842 = vmin.xlane.f32.xlu0 %v1841
      %v1843 = vpop.xlane.xlu0 %1842
      %v1844 = vcvt.f32.s32 %v1843
      %v1845 = vcvt.f32.s32 %v1839
      %v1846 = vshll.u32 %v1845, 16
      %v1847 = vadd.s32 %v1846, %v1844
      %v1848 = vsel %vm1406, %v1706, 2147483647
      %v1849 = vand.u32 %v1848, 65535
      %v1850 = vshra.s32 %v1848, 16
      %v1851 = vcvt.s32.f32 %v1849
      %v1852 = vcvt.s32.f32 %v1850
      %1853 = vmin.xlane.f32.xlu0 %v1852
      %v1854 = vpop.xlane.xlu0 %1853
      %vm1855 = vcmp.eq.f32.partialorder %v1852, %v1854
      %v1856 = vsel %vm1855, %v1851, inf
      %1857 = vmin.xlane.f32.xlu0 %v1856
      %v1858 = vpop.xlane.xlu0 %1857
      %v1859 = vcvt.f32.s32 %v1858
      %v1860 = vcvt.f32.s32 %v1854
      %v1861 = vshll.u32 %v1860, 16
      %v1862 = vadd.s32 %v1861, %v1859
      %v1863 = vsel %vm1406, %v1707, 2147483647
      %v1864 = vand.u32 %v1863, 65535
      %v1865 = vshra.s32 %v1863, 16
      %v1866 = vcvt.s32.f32 %v1864
      %v1867 = vcvt.s32.f32 %v1865
      %1868 = vmin.xlane.f32.xlu0 %v1867
      %v1869 = vpop.xlane.xlu0 %1868
      %vm1870 = vcmp.eq.f32.partialorder %v1867, %v1869
      %v1871 = vsel %vm1870, %v1866, inf
      %1872 = vmin.xlane.f32.xlu0 %v1871
      %v1873 = vpop.xlane.xlu0 %1872
      %v1874 = vcvt.f32.s32 %v1873
      %v1875 = vcvt.f32.s32 %v1869
      %v1876 = vshll.u32 %v1875, 16
      %v1877 = vadd.s32 %v1876, %v1874
      %v1878 = vsel %vm1406, %v1708, 2147483647
      %v1879 = vand.u32 %v1878, 65535
      %v1880 = vshra.s32 %v1878, 16
      %v1881 = vcvt.s32.f32 %v1879
      %v1882 = vcvt.s32.f32 %v1880
      %1883 = vmin.xlane.f32.xlu0 %v1882
      %v1884 = vpop.xlane.xlu0 %1883
      %vm1885 = vcmp.eq.f32.partialorder %v1882, %v1884
      %v1886 = vsel %vm1885, %v1881, inf
      %1887 = vmin.xlane.f32.xlu0 %v1886
      %v1888 = vpop.xlane.xlu0 %1887
      %v1889 = vcvt.f32.s32 %v1888
      %v1890 = vcvt.f32.s32 %v1884
      %v1891 = vshll.u32 %v1890, 16
      %v1892 = vadd.s32 %v1891, %v1889
      %v1893 = vsel %vm1406, %v1709, 2147483647
      %v1894 = vand.u32 %v1893, 65535
      %v1895 = vshra.s32 %v1893, 16
      %v1896 = vcvt.s32.f32 %v1894
      %v1897 = vcvt.s32.f32 %v1895
      %1898 = vmin.xlane.f32.xlu0 %v1897
      %v1899 = vpop.xlane.xlu0 %1898
      %vm1900 = vcmp.eq.f32.partialorder %v1897, %v1899
      %v1901 = vsel %vm1900, %v1896, inf
      %1902 = vmin.xlane.f32.xlu0 %v1901
      %v1903 = vpop.xlane.xlu0 %1902
      %v1904 = vcvt.f32.s32 %v1903
      %v1905 = vcvt.f32.s32 %v1899
      %v1906 = vshll.u32 %v1905, 16
      %v1907 = vadd.s32 %v1906, %v1904
      %v1908 = vsel %vm1406, %v1710, 2147483647
      %v1909 = vand.u32 %v1908, 65535
      %v1910 = vshra.s32 %v1908, 16
      %v1911 = vcvt.s32.f32 %v1909
      %v1912 = vcvt.s32.f32 %v1910
      %1913 = vmin.xlane.f32.xlu0 %v1912
      %v1914 = vpop.xlane.xlu0 %1913
      %vm1915 = vcmp.eq.f32.partialorder %v1912, %v1914
      %v1916 = vsel %vm1915, %v1911, inf
      %1917 = vmin.xlane.f32.xlu0 %v1916
      %v1918 = vpop.xlane.xlu0 %1917
      %v1919 = vcvt.f32.s32 %v1918
      %v1920 = vcvt.f32.s32 %v1914
      %v1921 = vshll.u32 %v1920, 16
      %v1922 = vadd.s32 %v1921, %v1919
      %v1923 = vsel %vm1406, %v1711, 2147483647
      %v1924 = vand.u32 %v1923, 65535
      %v1925 = vshra.s32 %v1923, 16
      %v1926 = vcvt.s32.f32 %v1924
      %v1927 = vcvt.s32.f32 %v1925
      %1928 = vmin.xlane.f32.xlu0 %v1927
      %v1929 = vpop.xlane.xlu0 %1928
      %vm1930 = vcmp.eq.f32.partialorder %v1927, %v1929
      %v1931 = vsel %vm1930, %v1926, inf
      %1932 = vmin.xlane.f32.xlu0 %v1931
      %v1933 = vpop.xlane.xlu0 %1932
      %v1934 = vcvt.f32.s32 %v1933
      %v1935 = vcvt.f32.s32 %v1929
      %v1936 = vshll.u32 %v1935, 16
      %v1937 = vadd.s32 %v1936, %v1934
      %v1938 = vsel %vm1406, %v1712, 2147483647
      %v1939 = vand.u32 %v1938, 65535
      %v1940 = vshra.s32 %v1938, 16
      %v1941 = vcvt.s32.f32 %v1939
      %v1942 = vcvt.s32.f32 %v1940
      %1943 = vmin.xlane.f32.xlu0 %v1942
      %v1944 = vpop.xlane.xlu0 %1943
      %vm1945 = vcmp.eq.f32.partialorder %v1942, %v1944
      %v1946 = vsel %vm1945, %v1941, inf
      %1947 = vmin.xlane.f32.xlu0 %v1946
      %v1948 = vpop.xlane.xlu0 %1947
      %v1949 = vcvt.f32.s32 %v1948
      %v1950 = vcvt.f32.s32 %v1944
      %v1951 = vshll.u32 %v1950, 16
      %v1952 = vadd.s32 %v1951, %v1949
      %vm1953 = vcmask 7168
      %1954 = vst.msk [vmem:[%s316] sm:$0xff] %vm1953, %v1727
      %1955 = vst.msk [vmem:[%s316 + $0x8] sm:$0xff] %vm1953, %v1742
      %1956 = vst.msk [vmem:[%s316 + $0x10] sm:$0xff] %vm1953, %v1757
      %1957 = vst.msk [vmem:[%s316 + $0x18] sm:$0xff] %vm1953, %v1772
      %1958 = vst.msk [vmem:[%s316 + $0x20] sm:$0xff] %vm1953, %v1787
      %1959 = vst.msk [vmem:[%s316 + $0x28] sm:$0xff] %vm1953, %v1802
      %1960 = vst.msk [vmem:[%s316 + $0x30] sm:$0xff] %vm1953, %v1817
      %1961 = vst.msk [vmem:[%s316 + $0x38] sm:$0xff] %vm1953, %v1832
      %1962 = vst.msk [vmem:[%s316 + $0x40] sm:$0xff] %vm1953, %v1847
      %1963 = vst.msk [vmem:[%s316 + $0x48] sm:$0xff] %vm1953, %v1862
      %1964 = vst.msk [vmem:[%s316 + $0x50] sm:$0xff] %vm1953, %v1877
      %1965 = vst.msk [vmem:[%s316 + $0x58] sm:$0xff] %vm1953, %v1892
      %1966 = vst.msk [vmem:[%s316 + $0x60] sm:$0xff] %vm1953, %v1907
      %1967 = vst.msk [vmem:[%s316 + $0x68] sm:$0xff] %vm1953, %v1922
      %1968 = vst.msk [vmem:[%s316 + $0x70] sm:$0xff] %vm1953, %v1937
      %1969 = vst.msk [vmem:[%s316 + $0x78] sm:$0xff] %vm1953, %v1952
      %s1970 = smul.u32 16, %s19
      %p1971 = scmp.lt.s32.totalorder %s1970, 31
      %s1972 = scalar_select %p1971, %s1970, 31
      %s1973 = smul.addr %s1972, 8
      %s1974 = scalar_lea.vmem %s6, %s1973
      %s1975 = smul.u32 16, %s19
      %p1976 = scmp.lt.s32.totalorder %s1975, 31
      %s1977 = scalar_select %p1976, %s1975, 31
      %s1978 = smul.addr %s1977, 8
      %s1979 = scalar_lea.vmem %s7, %s1978
      // Predicated region
      $region45: #{actor_forward.1} parent=43 // pred_check
        %p1980 = pneg %p173
      $region46: #{actor_forward.1} parent=43 // pred_check_branch
        %1982 = sbr.rel (%p1980) target = $region48
      $region47: #{actor_forward.1} parent=43 // pred_region
        %s1983 = smul.u32 16, %s19
      $region48: #{actor_forward.1} parent=43 // pred_fallthru
        _
      // Predicated region
      $region49: #{actor_forward.1} parent=43 // pred_check
        %p1984 = pneg %p199
      $region50: #{actor_forward.1} parent=43 // pred_check_branch
        %1986 = sbr.rel (%p1984) target = $region52
      $region51: #{actor_forward.1} parent=43 // pred_region
        %s1987 = smul.u32 16, %s19
      $region52: #{actor_forward.1} parent=43 // pred_fallthru
        _
    $region44: #{actor_forward.1} parent=5 // pred_fallthru
      _
    %p1988 = scmp.le.s32.totalorder 2, %s14
    // Predicated region
    $region53: #{actor_forward.1} parent=5 // pred_check
      %p1989 = pneg %p1988
    $region54: #{actor_forward.1} parent=5 // pred_check_branch
      %1991 = sbr.rel (%p1989) target = $region56
    $region55: #{actor_forward.1} parent=5 // pred_region
      %s1992 = ssub.s32 %s14, 2
      // Predicated region
      $region57: #{actor_forward.1} parent=55 // pred_check
        %p1993 = pneg %p179
      $region58: #{actor_forward.1} parent=55 // pred_check_branch
        %1995 = sbr.rel (%p1993) target = $region60
      $region59: #{actor_forward.1} parent=55 // pred_region
        %s1996 = smul.u32 16, %s20
        %p1997 = scmp.lt.s32.totalorder %s1996, 31
        %s1998 = scalar_select %p1997, %s1996, 31
        %s1999 = smul.addr %s1998, 8
        %s2000 = scalar_lea.vmem %s6, %s1999
      $region60: #{actor_forward.1} parent=55 // pred_fallthru
        _
      // Predicated region
      $region61: #{actor_forward.1} parent=55 // pred_check
        %p2001 = pneg %p205
      $region62: #{actor_forward.1} parent=55 // pred_check_branch
        %2003 = sbr.rel (%p2001) target = $region64
      $region63: #{actor_forward.1} parent=55 // pred_region
        %s2004 = smul.u32 16, %s20
        %p2005 = scmp.lt.s32.totalorder %s2004, 31
        %s2006 = scalar_select %p2005, %s2004, 31
        %s2007 = smul.addr %s2006, 8
        %s2008 = scalar_lea.vmem %s7, %s2007
      $region64: #{actor_forward.1} parent=55 // pred_fallthru
        _
    $region56: #{actor_forward.1} parent=5 // pred_fallthru
      _
  $region6: #{actor_forward.1} parent=0 // loop_footer
    %s18 = sadd.s32 1, %s14
  $region7: #{actor_forward.1} parent=0 // loop_footer_branch
    %13 = sbr.rel target = $region3
  $region8: #{actor_forward.1} parent=0 // loop_exit
    _

</llo_original>
